<compile_context>
chip_gen: v7x
topology: tpu7x:2x2x1
jax: 0.10.0
libtpu: 0.0.40
codegen_flags: <defaults>
</compile_context>

<pallas_src>
import math

import jax
import jax.numpy as jnp
from jax import lax
from jax.experimental import pallas as pl
from jax.experimental.pallas import tpu as pltpu

HEADS = 4
EPS = 1e-5  # PyTorch nn.LayerNorm default

# Row indices into the packed (6, D) per-feature parameter array.
_BO, _G1, _BE1, _B2, _G2, _BE2 = range(6)


def _layernorm(t, gain, shift):
    # Two-pass LN (matches torch.nn.LayerNorm; avoids E[x^2]-mu^2 cancellation).
    mu = jnp.mean(t, axis=-1, keepdims=True)
    d = t - mu
    var = jnp.mean(d * d, axis=-1, keepdims=True)
    return d * lax.rsqrt(var + EPS) * gain + shift


def transformer_layer_kernel(x_ref, pad_ref, amask_ref,
                             wqkv_ref, bqkv_ref, wo_ref,
                             w1_ref, b1_ref, w2_ref, vecs_ref,
                             o_ref, y_ref, acc_ref):
    """Grid: (batch tiles, FF reduction tiles).  Scratch: y (post-attn LN), acc (FFN)."""
    k_step = pl.program_id(1)
    n_k = pl.num_programs(1)

    Bt, Sm, S = amask_ref.shape          # Sm == 1 (key-padding mask) or S (full mask)
    R, D = x_ref.shape                   # R = Bt * S (row-flattened batch tile)
    dk = D // HEADS
    scale = 1.0 / math.sqrt(dk)

    # ---- attention + first residual/LN: once per batch tile (k == 0) --------
    @pl.when(k_step == 0)
    def _attention():
        x = x_ref[...]                                   # (R, D) f32
        pad = pad_ref[...]                               # (R, 1) f32, 1=keep 0=pad
        masked = amask_ref[...] != 0                     # (Bt, Sm, S) bool, nonzero = masked
        x_bf = x.astype(jnp.bfloat16)

        # Fused QKV projection: one MXU matmul with a 3x wider N, f32 accumulate.
        qkv = jnp.dot(x_bf, wqkv_ref[...],
                      preferred_element_type=jnp.float32) + bqkv_ref[...]   # (R, 3D) f32
        q = qkv[:, 0 * D:1 * D] * scale       # pre-scale q (cheaper than scaling scores)
        k = qkv[:, 1 * D:2 * D]
        v = qkv[:, 2 * D:3 * D]

        # Heads are contiguous lane slices of D; fold all B*H attention
        # problems into one batched contraction of size n = HEADS*Bt
        # (no 4-D transpose, no per-head python-loop matmuls).
        def split_heads(t):                  # (R, D) f32 -> (HEADS*Bt, S, dk) bf16
            return jnp.concatenate(
                [t[:, h * dk:(h + 1) * dk].reshape(Bt, S, dk) for h in range(HEADS)],
                axis=0).astype(jnp.bfloat16)

        qh = split_heads(q)
        kh = split_heads(k)
        vh = split_heads(v)

        s = jnp.einsum('nqd,nkd->nqk', qh, kh,
                       preferred_element_type=jnp.float32)          # (HEADS*Bt, S, S)
        # masked_fill: broadcast the (Bt, Sm, S) mask over heads (and queries if Sm==1).
        s = jnp.where(masked[None], -1e9,
                      s.reshape(HEADS, Bt, S, S)).reshape(HEADS * Bt, S, S)
        s = s - jnp.max(s, axis=-1, keepdims=True)
        p = jnp.exp(s)
        p = p / jnp.sum(p, axis=-1, keepdims=True)                  # exact softmax

        ctx = jnp.einsum('nqk,nkd->nqd', p.astype(jnp.bfloat16), vh,
                         preferred_element_type=jnp.float32)        # (HEADS*Bt, S, dk)
        # un-split heads back to contiguous lanes: feature = h*dk + d
        ctx = jnp.concatenate(
            [ctx[h * Bt:(h + 1) * Bt].reshape(R, dk) for h in range(HEADS)], axis=-1)

        attn = jnp.dot(ctx.astype(jnp.bfloat16), wo_ref[...],
                       preferred_element_type=jnp.float32) + vecs_ref[_BO:_BO + 1, :]

        # residual + LayerNorm, then paddingMask (dropout omitted: eval semantics)
        y = _layernorm(attn + x, vecs_ref[_G1:_G1 + 1, :], vecs_ref[_BE1:_BE1 + 1, :])
        y_ref[...] = y * pad
        acc_ref[...] = jnp.zeros_like(acc_ref)

    # ---- FFN chunk over the current FF tile: every k step --------------------
    y_bf = y_ref[...].astype(jnp.bfloat16)
    h1 = jnp.dot(y_bf, w1_ref[...],
                 preferred_element_type=jnp.float32) + b1_ref[...]   # (R, tk)
    h1 = jnp.maximum(h1, 0.0)
    acc_ref[...] += jnp.dot(h1.astype(jnp.bfloat16), w2_ref[...],
                            preferred_element_type=jnp.float32)      # (R, D)

    # ---- second residual/LN + paddingMask + store: last k step ---------------
    @pl.when(k_step == n_k - 1)
    def _finalize():
        f = acc_ref[...] + vecs_ref[_B2:_B2 + 1, :]
        z = _layernorm(f + y_ref[...], vecs_ref[_G2:_G2 + 1, :], vecs_ref[_BE2:_BE2 + 1, :])
        z = z * pad_ref[...]
        # Lane-flattened (R, D) store: dense vst for production D >= 128.
        o_ref[...] = z.astype(o_ref.dtype)


def _pick_batch_tile(B, S, target_rows=512):
    """Largest Bt dividing B with Bt*S <= target_rows (fills MXU rows per step)."""
    bt = max(1, min(B, target_rows // max(S, 1)))
    while B % bt:
        bt -= 1
    return bt


def _pick_ff_tile(FF):
    """FF reduction tile: a multiple of 256 (MXU-aligned) when it divides FF."""
    for tk in (512, 256):
        if FF % tk == 0:
            return tk
    return FF


def _vmem_limit_bytes():
    """Generation-aware scoped-VMEM limit: ~3/4 of physical, capped at 100 MiB
    (-> ~48 MiB on v7x's 64 MiB VMEM, ~96 MiB on v5e/v6e's 128 MiB)."""
    try:
        cap = int(pltpu.get_tpu_info().vmem_capacity_bytes)
    except Exception:
        cap = 128 * 1024 * 1024
    return int(min((cap * 3) // 4, 100 * 1024 * 1024))


def transformer_layer(x, padding_mask, attention_mask, params,
                      *, batch_tile=None, ff_tile=None):
    """x: (B,S,D) f32, padding_mask: (B,S,1) f32,
    attention_mask: (B,S,S) or (B,1,S), nonzero = masked."""
    (wq, bq, wk, bk, wv, bv, wo, bo, g1, be1, w1, b1, w2, b2, g2, be2) = params
    B, S, D = x.shape
    FF = w1.shape[1]
    assert D % HEADS == 0

    Bt = batch_tile if batch_tile is not None else _pick_batch_tile(B, S)
    tk = ff_tile if ff_tile is not None else _pick_ff_tile(FF)
    assert B % Bt == 0 and FF % tk == 0
    nB, nK = B // Bt, FF // tk
    R = Bt * S

    # Host-side parameter packing: fused QKV weight/bias, packed per-feature
    # vectors, bf16 matmul weights (f32 MXU accumulation in-kernel).
    wqkv = jnp.concatenate([wq, wk, wv], axis=1).astype(jnp.bfloat16)        # (D, 3D)
    bqkv = jnp.concatenate([bq, bk, bv], axis=1).astype(jnp.float32)         # (1, 3D)
    vecs = jnp.concatenate([bo, g1, be1, b2, g2, be2], axis=0).astype(jnp.float32)  # (6, D)
    wo_bf = wo.astype(jnp.bfloat16)
    w1_bf = w1.astype(jnp.bfloat16)
    b1_f = b1.astype(jnp.float32)
    w2_bf = w2.astype(jnp.bfloat16)

    # Mask as int8 ("nonzero = masked", same as torch masked_fill); callers with
    # key-padding-only masks can pass (B, 1, S) to cut mask DMA by S x.
    amask_i8 = (attention_mask != 0).astype(jnp.int8)
    Sm = amask_i8.shape[1]

    # Row-flatten activations so each grid step feeds (Bt*S, D) matmul streams.
    x2d = x.reshape(B * S, D)
    pad2d = padding_mask.reshape(B * S, 1)

    grid_spec = pltpu.PrefetchScalarGridSpec(
        num_scalar_prefetch=0,
        grid=(nB, nK),
        in_specs=[
            pl.BlockSpec((R, D), lambda i, k: (i, 0)),          # contextWords (flattened)
            pl.BlockSpec((R, 1), lambda i, k: (i, 0)),          # paddingMask (flattened)
            pl.BlockSpec((Bt, Sm, S), lambda i, k: (i, 0, 0)),  # attentionMask (int8)
            pl.BlockSpec(wqkv.shape, lambda i, k: (0, 0)),      # fused QKV weight
            pl.BlockSpec(bqkv.shape, lambda i, k: (0, 0)),      # fused QKV bias
            pl.BlockSpec(wo_bf.shape, lambda i, k: (0, 0)),     # output proj weight
            pl.BlockSpec((D, tk), lambda i, k: (0, k)),         # w1 (FF-tiled)
            pl.BlockSpec((1, tk), lambda i, k: (0, k)),         # b1 (FF-tiled)
            pl.BlockSpec((tk, D), lambda i, k: (k, 0)),         # w2 (FF-tiled)
            pl.BlockSpec(vecs.shape, lambda i, k: (0, 0)),      # packed per-feature vectors
        ],
        out_specs=pl.BlockSpec((R, D), lambda i, k: (i, 0)),
        scratch_shapes=[pltpu.VMEM((R, D), jnp.float32),        # y (post-attn LN output)
                        pltpu.VMEM((R, D), jnp.float32)],       # FFN accumulator
    )

    out2d = pl.pallas_call(
        transformer_layer_kernel,
        out_shape=jax.ShapeDtypeStruct((B * S, D), x.dtype),
        grid_spec=grid_spec,
        compiler_params=pltpu.CompilerParams(
            dimension_semantics=("parallel", "arbitrary"),
            vmem_limit_bytes=_vmem_limit_bytes(),
        ),
    )(x2d, pad2d, amask_i8, wqkv, bqkv, wo_bf, w1_bf, b1_f, w2_bf, vecs)

    return out2d.reshape(B, S, D)


def reference(x, pad, amask, params):
    """Plain-JAX f32 reference mirroring the PyTorch forward (eval mode)."""
    (wq, bq, wk, bk, wv, bv, wo, bo, g1, be1, w1, b1, w2, b2, g2, be2) = params
    B, S, D = x.shape
    dk = D // HEADS
    q = x @ wq + bq
    k = x @ wk + bk
    v = x @ wv + bv
    qh = q.reshape(B, S, HEADS, dk).transpose(0, 2, 1, 3)
    kh = k.reshape(B, S, HEADS, dk).transpose(0, 2, 1, 3)
    vh = v.reshape(B, S, HEADS, dk).transpose(0, 2, 1, 3)
    s = jnp.einsum('bhqd,bhkd->bhqk', qh, kh) / math.sqrt(dk)
    masked = (amask != 0)[:, None, :, :]       # (B,1,Sm,S) broadcasts over heads/queries
    s = jnp.where(masked, -1e9, s)
    p = jax.nn.softmax(s, axis=-1)
    ctx = jnp.einsum('bhqk,bhkd->bhqd', p, vh).transpose(0, 2, 1, 3).reshape(B, S, D)
    attn = ctx @ wo + bo

    def ln(t, g, b):
        mu = t.mean(-1, keepdims=True)
        var = ((t - mu) ** 2).mean(-1, keepdims=True)
        return (t - mu) / jnp.sqrt(var + EPS) * g + b

    y = ln(attn + x, g1, be1) * pad
    h1 = jnp.maximum(y @ w1 + b1, 0.0)
    z = ln(h1 @ w2 + b2 + y, g2, be2) * pad
    return z


if __name__ == "__main__":
    # small shapes: batch=2, seq=8, vectorDim == hiddenDim == 32, 4 heads
    B, S, D = 2, 8, 32
    FF = D  # PositionwiseFeedForward(hiddenDim): inner dim == hiddenDim

    key = jax.random.PRNGKey(0)
    ks = jax.random.split(key, 10)
    sc = 0.1
    wq = sc * jax.random.normal(ks[0], (D, D), jnp.float32)
    wk = sc * jax.random.normal(ks[1], (D, D), jnp.float32)
    wv = sc * jax.random.normal(ks[2], (D, D), jnp.float32)
    wo = sc * jax.random.normal(ks[3], (D, D), jnp.float32)
    w1 = sc * jax.random.normal(ks[4], (D, FF), jnp.float32)
    w2 = sc * jax.random.normal(ks[5], (FF, D), jnp.float32)
    bq = jnp.zeros((1, D), jnp.float32)
    bk = jnp.zeros((1, D), jnp.float32)
    bv = jnp.zeros((1, D), jnp.float32)
    bo = 0.01 * jnp.ones((1, D), jnp.float32)
    b1 = 0.01 * jnp.ones((1, FF), jnp.float32)
    b2 = 0.01 * jnp.ones((1, D), jnp.float32)
    g1 = jnp.ones((1, D), jnp.float32)
    be1 = jnp.zeros((1, D), jnp.float32)
    g2 = jnp.ones((1, D), jnp.float32)
    be2 = jnp.zeros((1, D), jnp.float32)
    params = (wq, bq, wk, bk, wv, bv, wo, bo, g1, be1, w1, b1, w2, b2, g2, be2)

    x = jax.random.normal(ks[6], (B, S, D), jnp.float32)
    # last 2 positions of every sequence are padding
    valid = (jnp.arange(S) < S - 2)
    padding_mask = jnp.broadcast_to(valid.astype(jnp.float32)[None, :, None], (B, S, 1)) + 0.0
    # key-padding-only attention mask, shipped as (B, 1, S): nonzero = masked
    attention_mask = jnp.broadcast_to(
        (~valid).astype(jnp.float32)[None, None, :], (B, 1, S)) + 0.0

    out = transformer_layer(x, padding_mask, attention_mask, params)
    out = jax.block_until_ready(out)

    ref = reference(x, padding_mask, attention_mask, params)
    assert out.shape == (B, S, D)
    # bf16 matmul inputs (f32 accumulate); softmax/LN/residual math in f32 with
    # exact normalization, so tolerance is tighter than the previous revision.
    err = float(jnp.max(jnp.abs(out - ref)))
    assert jnp.allclose(out, ref, atol=3e-2, rtol=3e-2), err
    print("KERNEL_OK")
</pallas_src>

<mosaic_0001>
module attributes {stable_mosaic.version = 11 : i64} {
  func.func @transformer_layer_kernel(%arg0: i32, %arg1: i32, %arg2: memref<16x32xf32, #tpu.memory_space<vmem>>, %arg3: memref<16x1xf32, #tpu.memory_space<vmem>>, %arg4: memref<2x1x8xi8, #tpu.memory_space<vmem>>, %arg5: memref<32x96xbf16, #tpu.memory_space<vmem>>, %arg6: memref<1x96xf32, #tpu.memory_space<vmem>>, %arg7: memref<32x32xbf16, #tpu.memory_space<vmem>>, %arg8: memref<32x32xbf16, #tpu.memory_space<vmem>>, %arg9: memref<1x32xf32, #tpu.memory_space<vmem>>, %arg10: memref<32x32xbf16, #tpu.memory_space<vmem>>, %arg11: memref<6x32xf32, #tpu.memory_space<vmem>>, %arg12: memref<16x32xf32, #tpu.memory_space<vmem>>, %arg13: memref<16x32xf32, #tpu.memory_space<vmem>>, %arg14: memref<16x32xf32, #tpu.memory_space<vmem>>) attributes {dimension_semantics = [#tpu.dimension_semantics<parallel>, #tpu.dimension_semantics<arbitrary>], iteration_bounds = array<i64: 1, 1>, scalar_prefetch = 0 : i64, scratch_operands = 2 : i64, tpu.core_type = #tpu.core_type<tc>, window_params = [{transform_indices = @transform_0, window_bounds = array<i64: 16, 32>}, {transform_indices = @transform_1, window_bounds = array<i64: 16, 1>}, {transform_indices = @transform_2, window_bounds = array<i64: 2, 1, 8>}, {pipeline_mode = #tpu.pipeline_mode<synchronous>, transform_indices = @transform_3, window_bounds = array<i64: 32, 96>}, {pipeline_mode = #tpu.pipeline_mode<synchronous>, transform_indices = @transform_4, window_bounds = array<i64: 1, 96>}, {pipeline_mode = #tpu.pipeline_mode<synchronous>, transform_indices = @transform_5, window_bounds = array<i64: 32, 32>}, {transform_indices = @transform_6, window_bounds = array<i64: 32, 32>}, {transform_indices = @transform_7, window_bounds = array<i64: 1, 32>}, {transform_indices = @transform_8, window_bounds = array<i64: 32, 32>}, {pipeline_mode = #tpu.pipeline_mode<synchronous>, transform_indices = @transform_9, window_bounds = array<i64: 6, 32>}, {transform_indices = @transform_10, window_bounds = array<i64: 16, 32>}]} {
    %c0_i32 = arith.constant 0 : i32
    %0 = arith.cmpi eq, %arg1, %c0_i32 : i32
    %1 = arith.extui %0 : i1 to i32
    %c0_i32_0 = arith.constant 0 : i32
    %2 = arith.cmpi ne, %1, %c0_i32_0 : i32
    scf.if %2 {
      %c0_16 = arith.constant 0 : index
      %c0_17 = arith.constant 0 : index
      %21 = vector.load %arg2[%c0_16, %c0_17] : memref<16x32xf32, #tpu.memory_space<vmem>>, vector<16x32xf32>
      %c0_18 = arith.constant 0 : index
      %c0_19 = arith.constant 0 : index
      %22 = vector.load %arg3[%c0_18, %c0_19] : memref<16x1xf32, #tpu.memory_space<vmem>>, vector<16x1xf32>
      %c0_20 = arith.constant 0 : index
      %c0_21 = arith.constant 0 : index
      %c0_22 = arith.constant 0 : index
      %23 = vector.load %arg4[%c0_20, %c0_21, %c0_22] : memref<2x1x8xi8, #tpu.memory_space<vmem>>, vector<2x1x8xi8>
      %c0_i8 = arith.constant 0 : i8
      %24 = vector.broadcast %c0_i8 : i8 to vector<2x1x8xi8>
      %25 = arith.cmpi ne, %23, %24 : vector<2x1x8xi8>
      %26 = arith.truncf %21 : vector<16x32xf32> to vector<16x32xbf16>
      %c0_23 = arith.constant 0 : index
      %c0_24 = arith.constant 0 : index
      %27 = vector.load %arg5[%c0_23, %c0_24] : memref<32x96xbf16, #tpu.memory_space<vmem>>, vector<32x96xbf16>
      %cst_25 = arith.constant dense<0.000000e+00> : vector<16x96xf32>
      %28 = tpu.matmul %26, %27, %cst_25 {dimension_numbers = #tpu.dot_dimension_numbers<[1], [0], [0], [1], [0, 0, 1, 1], [], []>} : vector<16x32xbf16>, vector<32x96xbf16>, vector<16x96xf32> -> vector<16x96xf32>
      %c0_26 = arith.constant 0 : index
      %c0_27 = arith.constant 0 : index
      %29 = vector.load %arg6[%c0_26, %c0_27] : memref<1x96xf32, #tpu.memory_space<vmem>>, vector<1x96xf32>
      %30 = vector.broadcast %29 : vector<1x96xf32> to vector<16x96xf32>
      %31 = arith.addf %28, %30 : vector<16x96xf32>
      %32 = vector.extract_strided_slice %31 {offsets = [0, 0], sizes = [16, 32], strides = [1, 1]} : vector<16x96xf32> to vector<16x32xf32>
      %cst_28 = arith.constant 0.353553385 : f32
      %33 = vector.broadcast %cst_28 : f32 to vector<16x32xf32>
      %34 = arith.mulf %32, %33 : vector<16x32xf32>
      %35 = vector.extract_strided_slice %31 {offsets = [0, 32], sizes = [16, 32], strides = [1, 1]} : vector<16x96xf32> to vector<16x32xf32>
      %36 = vector.extract_strided_slice %31 {offsets = [0, 64], sizes = [16, 32], strides = [1, 1]} : vector<16x96xf32> to vector<16x32xf32>
      %37 = vector.extract_strided_slice %34 {offsets = [0, 0], sizes = [16, 8], strides = [1, 1]} : vector<16x32xf32> to vector<16x8xf32>
      %38 = vector.shape_cast %37 : vector<16x8xf32> to vector<2x8x8xf32>
      %39 = vector.extract_strided_slice %34 {offsets = [0, 8], sizes = [16, 8], strides = [1, 1]} : vector<16x32xf32> to vector<16x8xf32>
      %40 = vector.shape_cast %39 : vector<16x8xf32> to vector<2x8x8xf32>
      %41 = vector.extract_strided_slice %34 {offsets = [0, 16], sizes = [16, 8], strides = [1, 1]} : vector<16x32xf32> to vector<16x8xf32>
      %42 = vector.shape_cast %41 : vector<16x8xf32> to vector<2x8x8xf32>
      %43 = vector.extract_strided_slice %34 {offsets = [0, 24], sizes = [16, 8], strides = [1, 1]} : vector<16x32xf32> to vector<16x8xf32>
      %44 = vector.shape_cast %43 : vector<16x8xf32> to vector<2x8x8xf32>
      %45 = tpu.concatenate %38, %40, %42, %44 in 0 : vector<2x8x8xf32>, vector<2x8x8xf32>, vector<2x8x8xf32>, vector<2x8x8xf32> -> vector<8x8x8xf32>
      %46 = arith.truncf %45 : vector<8x8x8xf32> to vector<8x8x8xbf16>
      %47 = vector.extract_strided_slice %35 {offsets = [0, 0], sizes = [16, 8], strides = [1, 1]} : vector<16x32xf32> to vector<16x8xf32>
      %48 = vector.shape_cast %47 : vector<16x8xf32> to vector<2x8x8xf32>
      %49 = vector.extract_strided_slice %35 {offsets = [0, 8], sizes = [16, 8], strides = [1, 1]} : vector<16x32xf32> to vector<16x8xf32>
      %50 = vector.shape_cast %49 : vector<16x8xf32> to vector<2x8x8xf32>
      %51 = vector.extract_strided_slice %35 {offsets = [0, 16], sizes = [16, 8], strides = [1, 1]} : vector<16x32xf32> to vector<16x8xf32>
      %52 = vector.shape_cast %51 : vector<16x8xf32> to vector<2x8x8xf32>
      %53 = vector.extract_strided_slice %35 {offsets = [0, 24], sizes = [16, 8], strides = [1, 1]} : vector<16x32xf32> to vector<16x8xf32>
      %54 = vector.shape_cast %53 : vector<16x8xf32> to vector<2x8x8xf32>
      %55 = tpu.concatenate %48, %50, %52, %54 in 0 : vector<2x8x8xf32>, vector<2x8x8xf32>, vector<2x8x8xf32>, vector<2x8x8xf32> -> vector<8x8x8xf32>
      %56 = arith.truncf %55 : vector<8x8x8xf32> to vector<8x8x8xbf16>
      %57 = vector.extract_strided_slice %36 {offsets = [0, 0], sizes = [16, 8], strides = [1, 1]} : vector<16x32xf32> to vector<16x8xf32>
      %58 = vector.shape_cast %57 : vector<16x8xf32> to vector<2x8x8xf32>
      %59 = vector.extract_strided_slice %36 {offsets = [0, 8], sizes = [16, 8], strides = [1, 1]} : vector<16x32xf32> to vector<16x8xf32>
      %60 = vector.shape_cast %59 : vector<16x8xf32> to vector<2x8x8xf32>
      %61 = vector.extract_strided_slice %36 {offsets = [0, 16], sizes = [16, 8], strides = [1, 1]} : vector<16x32xf32> to vector<16x8xf32>
      %62 = vector.shape_cast %61 : vector<16x8xf32> to vector<2x8x8xf32>
      %63 = vector.extract_strided_slice %36 {offsets = [0, 24], sizes = [16, 8], strides = [1, 1]} : vector<16x32xf32> to vector<16x8xf32>
      %64 = vector.shape_cast %63 : vector<16x8xf32> to vector<2x8x8xf32>
      %65 = tpu.concatenate %58, %60, %62, %64 in 0 : vector<2x8x8xf32>, vector<2x8x8xf32>, vector<2x8x8xf32>, vector<2x8x8xf32> -> vector<8x8x8xf32>
      %66 = arith.truncf %65 : vector<8x8x8xf32> to vector<8x8x8xbf16>
      "tpu.trace_start"() <{level = 10 : i32, message = "nqd,nkd->nqk"}> : () -> ()
      %cst_29 = arith.constant dense<0.000000e+00> : vector<8x8x8xf32>
      %67 = tpu.matmul %46, %56, %cst_29 {dimension_numbers = #tpu.dot_dimension_numbers<[2], [2], [1], [1], [0, 0, 0, 1, 1, 1], [0], [0]>} : vector<8x8x8xbf16>, vector<8x8x8xbf16>, vector<8x8x8xf32> -> vector<8x8x8xf32>
      "tpu.trace_stop"() : () -> ()
      %68 = vector.shape_cast %25 : vector<2x1x8xi1> to vector<1x2x1x8xi1>
      %69 = vector.shape_cast %67 : vector<8x8x8xf32> to vector<4x2x8x8xf32>
      %cst_30 = arith.constant -1.000000e+09 : f32
      %70 = vector.shape_cast %68 : vector<1x2x1x8xi1> to vector<1x2x1x8xi1>
      %71 = vector.broadcast %70 : vector<1x2x1x8xi1> to vector<4x2x8x8xi1>
      %72 = vector.broadcast %cst_30 : f32 to vector<4x2x8x8xf32>
      %73 = arith.select %71, %72, %69 : vector<4x2x8x8xi1>, vector<4x2x8x8xf32>
      %74 = vector.shape_cast %73 : vector<4x2x8x8xf32> to vector<8x8x8xf32>
      %cst_31 = arith.constant dense<0xFF800000> : vector<8x8xf32>
      %75 = vector.multi_reduction <maximumf>, %74, %cst_31 [2] : vector<8x8x8xf32> to vector<8x8xf32>
      %76 = vector.shape_cast %75 : vector<8x8xf32> to vector<8x8x1xf32>
      %77 = vector.broadcast %76 : vector<8x8x1xf32> to vector<8x8x8xf32>
      %78 = arith.subf %74, %77 : vector<8x8x8xf32>
      %79 = math.exp %78 : vector<8x8x8xf32>
      %cst_32 = arith.constant dense<0.000000e+00> : vector<8x8xf32>
      %80 = vector.multi_reduction <add>, %79, %cst_32 [2] : vector<8x8x8xf32> to vector<8x8xf32>
      %81 = vector.shape_cast %80 : vector<8x8xf32> to vector<8x8x1xf32>
      %82 = vector.broadcast %81 : vector<8x8x1xf32> to vector<8x8x8xf32>
      %83 = arith.divf %79, %82 : vector<8x8x8xf32>
      %84 = arith.truncf %83 : vector<8x8x8xf32> to vector<8x8x8xbf16>
      "tpu.trace_start"() <{level = 10 : i32, message = "nqk,nkd->nqd"}> : () -> ()
      %cst_33 = arith.constant dense<0.000000e+00> : vector<8x8x8xf32>
      %85 = tpu.matmul %84, %66, %cst_33 {dimension_numbers = #tpu.dot_dimension_numbers<[2], [1], [1], [2], [0, 0, 0, 1, 1, 2], [0], [0]>} : vector<8x8x8xbf16>, vector<8x8x8xbf16>, vector<8x8x8xf32> -> vector<8x8x8xf32>
      "tpu.trace_stop"() : () -> ()
      %86 = vector.extract_strided_slice %85 {offsets = [0, 0, 0], sizes = [2, 8, 8], strides = [1, 1, 1]} : vector<8x8x8xf32> to vector<2x8x8xf32>
      %87 = vector.shape_cast %86 : vector<2x8x8xf32> to vector<16x8xf32>
      %88 = vector.extract_strided_slice %85 {offsets = [2, 0, 0], sizes = [2, 8, 8], strides = [1, 1, 1]} : vector<8x8x8xf32> to vector<2x8x8xf32>
      %89 = vector.shape_cast %88 : vector<2x8x8xf32> to vector<16x8xf32>
      %90 = vector.extract_strided_slice %85 {offsets = [4, 0, 0], sizes = [2, 8, 8], strides = [1, 1, 1]} : vector<8x8x8xf32> to vector<2x8x8xf32>
      %91 = vector.shape_cast %90 : vector<2x8x8xf32> to vector<16x8xf32>
      %92 = vector.extract_strided_slice %85 {offsets = [6, 0, 0], sizes = [2, 8, 8], strides = [1, 1, 1]} : vector<8x8x8xf32> to vector<2x8x8xf32>
      %93 = vector.shape_cast %92 : vector<2x8x8xf32> to vector<16x8xf32>
      %94 = tpu.concatenate %87, %89, %91, %93 in 1 : vector<16x8xf32>, vector<16x8xf32>, vector<16x8xf32>, vector<16x8xf32> -> vector<16x32xf32>
      %95 = arith.truncf %94 : vector<16x32xf32> to vector<16x32xbf16>
      %c0_34 = arith.constant 0 : index
      %c0_35 = arith.constant 0 : index
      %96 = vector.load %arg7[%c0_34, %c0_35] : memref<32x32xbf16, #tpu.memory_space<vmem>>, vector<32x32xbf16>
      %cst_36 = arith.constant dense<0.000000e+00> : vector<16x32xf32>
      %97 = tpu.matmul %95, %96, %cst_36 {dimension_numbers = #tpu.dot_dimension_numbers<[1], [0], [0], [1], [0, 0, 1, 1], [], []>} : vector<16x32xbf16>, vector<32x32xbf16>, vector<16x32xf32> -> vector<16x32xf32>
      %c0_37 = arith.constant 0 : index
      %c0_38 = arith.constant 0 : index
      %98 = vector.load %arg11[%c0_37, %c0_38] : memref<6x32xf32, #tpu.memory_space<vmem>>, vector<1x32xf32>
      %99 = vector.broadcast %98 : vector<1x32xf32> to vector<16x32xf32>
      %100 = arith.addf %97, %99 : vector<16x32xf32>
      %101 = arith.addf %100, %21 : vector<16x32xf32>
      %c1 = arith.constant 1 : index
      %c0_39 = arith.constant 0 : index
      %102 = vector.load %arg11[%c1, %c0_39] : memref<6x32xf32, #tpu.memory_space<vmem>>, vector<1x32xf32>
      %c2 = arith.constant 2 : index
      %c0_40 = arith.constant 0 : index
      %103 = vector.load %arg11[%c2, %c0_40] : memref<6x32xf32, #tpu.memory_space<vmem>>, vector<1x32xf32>
      %cst_41 = arith.constant dense<0.000000e+00> : vector<16xf32>
      %104 = vector.multi_reduction <add>, %101, %cst_41 [1] : vector<16x32xf32> to vector<16xf32>
      %105 = vector.shape_cast %104 : vector<16xf32> to vector<16x1xf32>
      %cst_42 = arith.constant 3.200000e+01 : f32
      %106 = vector.broadcast %cst_42 : f32 to vector<16x1xf32>
      %107 = arith.divf %105, %106 : vector<16x1xf32>
      %108 = vector.broadcast %107 : vector<16x1xf32> to vector<16x32xf32>
      %109 = arith.subf %101, %108 : vector<16x32xf32>
      %110 = arith.mulf %109, %109 : vector<16x32xf32>
      %cst_43 = arith.constant dense<0.000000e+00> : vector<16xf32>
      %111 = vector.multi_reduction <add>, %110, %cst_43 [1] : vector<16x32xf32> to vector<16xf32>
      %112 = vector.shape_cast %111 : vector<16xf32> to vector<16x1xf32>
      %cst_44 = arith.constant 3.200000e+01 : f32
      %113 = vector.broadcast %cst_44 : f32 to vector<16x1xf32>
      %114 = arith.divf %112, %113 : vector<16x1xf32>
      %cst_45 = arith.constant 9.99999974E-6 : f32
      %115 = vector.broadcast %cst_45 : f32 to vector<16x1xf32>
      %116 = arith.addf %114, %115 : vector<16x1xf32>
      %117 = math.rsqrt %116 : vector<16x1xf32>
      %118 = vector.broadcast %117 : vector<16x1xf32> to vector<16x32xf32>
      %119 = arith.mulf %109, %118 : vector<16x32xf32>
      %120 = vector.broadcast %102 : vector<1x32xf32> to vector<16x32xf32>
      %121 = arith.mulf %119, %120 : vector<16x32xf32>
      %122 = vector.broadcast %103 : vector<1x32xf32> to vector<16x32xf32>
      %123 = arith.addf %121, %122 : vector<16x32xf32>
      %124 = vector.broadcast %22 : vector<16x1xf32> to vector<16x32xf32>
      %125 = arith.mulf %123, %124 : vector<16x32xf32>
      %c0_46 = arith.constant 0 : index
      %c0_47 = arith.constant 0 : index
      %126 = vector.load %arg13[%c0_46, %c0_47] : memref<16x32xf32, #tpu.memory_space<vmem>>, vector<16x32xf32>
      tpu.vector_store %arg13[%c0_46, %c0_47], %125 {strides = array<i32>} : memref<16x32xf32, #tpu.memory_space<vmem>>, vector<16x32xf32>,
      %cst_48 = arith.constant 0.000000e+00 : f32
      %127 = vector.broadcast %cst_48 : f32 to vector<16x32xf32>
      %c0_49 = arith.constant 0 : index
      %c0_50 = arith.constant 0 : index
      %128 = vector.load %arg14[%c0_49, %c0_50] : memref<16x32xf32, #tpu.memory_space<vmem>>, vector<16x32xf32>
      tpu.vector_store %arg14[%c0_49, %c0_50], %127 {strides = array<i32>} : memref<16x32xf32, #tpu.memory_space<vmem>>, vector<16x32xf32>,
    } else {
    }
    %c0 = arith.constant 0 : index
    %c0_1 = arith.constant 0 : index
    %3 = vector.load %arg13[%c0, %c0_1] : memref<16x32xf32, #tpu.memory_space<vmem>>, vector<16x32xf32>
    %4 = arith.truncf %3 : vector<16x32xf32> to vector<16x32xbf16>
    %c0_2 = arith.constant 0 : index
    %c0_3 = arith.constant 0 : index
    %5 = vector.load %arg8[%c0_2, %c0_3] : memref<32x32xbf16, #tpu.memory_space<vmem>>, vector<32x32xbf16>
    %cst = arith.constant dense<0.000000e+00> : vector<16x32xf32>
    %6 = tpu.matmul %4, %5, %cst {dimension_numbers = #tpu.dot_dimension_numbers<[1], [0], [0], [1], [0, 0, 1, 1], [], []>} : vector<16x32xbf16>, vector<32x32xbf16>, vector<16x32xf32> -> vector<16x32xf32>
    %c0_4 = arith.constant 0 : index
    %c0_5 = arith.constant 0 : index
    %7 = vector.load %arg9[%c0_4, %c0_5] : memref<1x32xf32, #tpu.memory_space<vmem>>, vector<1x32xf32>
    %8 = vector.broadcast %7 : vector<1x32xf32> to vector<16x32xf32>
    %9 = arith.addf %6, %8 : vector<16x32xf32>
    %cst_6 = arith.constant 0.000000e+00 : f32
    %10 = vector.broadcast %cst_6 : f32 to vector<16x32xf32>
    %11 = arith.maximumf %9, %10 : vector<16x32xf32>
    %c0_7 = arith.constant 0 : index
    %c0_8 = arith.constant 0 : index
    %12 = vector.load %arg14[%c0_7, %c0_8] : memref<16x32xf32, #tpu.memory_space<vmem>>, vector<16x32xf32>
    %13 = arith.truncf %11 : vector<16x32xf32> to vector<16x32xbf16>
    %c0_9 = arith.constant 0 : index
    %c0_10 = arith.constant 0 : index
    %14 = vector.load %arg10[%c0_9, %c0_10] : memref<32x32xbf16, #tpu.memory_space<vmem>>, vector<32x32xbf16>
    %cst_11 = arith.constant dense<0.000000e+00> : vector<16x32xf32>
    %15 = tpu.matmul %13, %14, %cst_11 {dimension_numbers = #tpu.dot_dimension_numbers<[1], [0], [0], [1], [0, 0, 1, 1], [], []>} : vector<16x32xbf16>, vector<32x32xbf16>, vector<16x32xf32> -> vector<16x32xf32>
    %16 = arith.addf %12, %15 : vector<16x32xf32>
    %c0_12 = arith.constant 0 : index
    %c0_13 = arith.constant 0 : index
    %17 = vector.load %arg14[%c0_12, %c0_13] : memref<16x32xf32, #tpu.memory_space<vmem>>, vector<16x32xf32>
    tpu.vector_store %arg14[%c0_12, %c0_13], %16 {strides = array<i32>} : memref<16x32xf32, #tpu.memory_space<vmem>>, vector<16x32xf32>,
    %c0_i32_14 = arith.constant 0 : i32
    %18 = arith.cmpi eq, %arg1, %c0_i32_14 : i32
    %19 = arith.extui %18 : i1 to i32
    %c0_i32_15 = arith.constant 0 : i32
    %20 = arith.cmpi ne, %19, %c0_i32_15 : i32
    scf.if %20 {
      %c0_16 = arith.constant 0 : index
      %c0_17 = arith.constant 0 : index
      %21 = vector.load %arg14[%c0_16, %c0_17] : memref<16x32xf32, #tpu.memory_space<vmem>>, vector<16x32xf32>
      %c3 = arith.constant 3 : index
      %c0_18 = arith.constant 0 : index
      %22 = vector.load %arg11[%c3, %c0_18] : memref<6x32xf32, #tpu.memory_space<vmem>>, vector<1x32xf32>
      %23 = vector.broadcast %22 : vector<1x32xf32> to vector<16x32xf32>
      %24 = arith.addf %21, %23 : vector<16x32xf32>
      %c0_19 = arith.constant 0 : index
      %c0_20 = arith.constant 0 : index
      %25 = vector.load %arg13[%c0_19, %c0_20] : memref<16x32xf32, #tpu.memory_space<vmem>>, vector<16x32xf32>
      %26 = arith.addf %24, %25 : vector<16x32xf32>
      %c4 = arith.constant 4 : index
      %c0_21 = arith.constant 0 : index
      %27 = vector.load %arg11[%c4, %c0_21] : memref<6x32xf32, #tpu.memory_space<vmem>>, vector<1x32xf32>
      %c5 = arith.constant 5 : index
      %c0_22 = arith.constant 0 : index
      %28 = vector.load %arg11[%c5, %c0_22] : memref<6x32xf32, #tpu.memory_space<vmem>>, vector<1x32xf32>
      %cst_23 = arith.constant dense<0.000000e+00> : vector<16xf32>
      %29 = vector.multi_reduction <add>, %26, %cst_23 [1] : vector<16x32xf32> to vector<16xf32>
      %30 = vector.shape_cast %29 : vector<16xf32> to vector<16x1xf32>
      %cst_24 = arith.constant 3.200000e+01 : f32
      %31 = vector.broadcast %cst_24 : f32 to vector<16x1xf32>
      %32 = arith.divf %30, %31 : vector<16x1xf32>
      %33 = vector.broadcast %32 : vector<16x1xf32> to vector<16x32xf32>
      %34 = arith.subf %26, %33 : vector<16x32xf32>
      %35 = arith.mulf %34, %34 : vector<16x32xf32>
      %cst_25 = arith.constant dense<0.000000e+00> : vector<16xf32>
      %36 = vector.multi_reduction <add>, %35, %cst_25 [1] : vector<16x32xf32> to vector<16xf32>
      %37 = vector.shape_cast %36 : vector<16xf32> to vector<16x1xf32>
      %cst_26 = arith.constant 3.200000e+01 : f32
      %38 = vector.broadcast %cst_26 : f32 to vector<16x1xf32>
      %39 = arith.divf %37, %38 : vector<16x1xf32>
      %cst_27 = arith.constant 9.99999974E-6 : f32
      %40 = vector.broadcast %cst_27 : f32 to vector<16x1xf32>
      %41 = arith.addf %39, %40 : vector<16x1xf32>
      %42 = math.rsqrt %41 : vector<16x1xf32>
      %43 = vector.broadcast %42 : vector<16x1xf32> to vector<16x32xf32>
      %44 = arith.mulf %34, %43 : vector<16x32xf32>
      %45 = vector.broadcast %27 : vector<1x32xf32> to vector<16x32xf32>
      %46 = arith.mulf %44, %45 : vector<16x32xf32>
      %47 = vector.broadcast %28 : vector<1x32xf32> to vector<16x32xf32>
      %48 = arith.addf %46, %47 : vector<16x32xf32>
      %c0_28 = arith.constant 0 : index
      %c0_29 = arith.constant 0 : index
      %49 = vector.load %arg3[%c0_28, %c0_29] : memref<16x1xf32, #tpu.memory_space<vmem>>, vector<16x1xf32>
      %50 = vector.broadcast %49 : vector<16x1xf32> to vector<16x32xf32>
      %51 = arith.mulf %48, %50 : vector<16x32xf32>
      %c0_30 = arith.constant 0 : index
      %c0_31 = arith.constant 0 : index
      %52 = vector.load %arg12[%c0_30, %c0_31] : memref<16x32xf32, #tpu.memory_space<vmem>>, vector<16x32xf32>
      tpu.vector_store %arg12[%c0_30, %c0_31], %51 {strides = array<i32>} : memref<16x32xf32, #tpu.memory_space<vmem>>, vector<16x32xf32>,
    } else {
    }
    return
  }
  func.func @transform_0(%arg0: i32, %arg1: i32) -> (i32, i32) {
    %c0_i32 = arith.constant 0 : i32
    %c0_i32_0 = arith.constant 0 : i32
    return %arg0, %c0_i32 : i32, i32
  }
  func.func @transform_1(%arg0: i32, %arg1: i32) -> (i32, i32) {
    %c0_i32 = arith.constant 0 : i32
    %c0_i32_0 = arith.constant 0 : i32
    return %arg0, %c0_i32 : i32, i32
  }
  func.func @transform_2(%arg0: i32, %arg1: i32) -> (i32, i32, i32) {
    %c0_i32 = arith.constant 0 : i32
    %c0_i32_0 = arith.constant 0 : i32
    %c0_i32_1 = arith.constant 0 : i32
    return %arg0, %c0_i32, %c0_i32_0 : i32, i32, i32
  }
  func.func @transform_3(%arg0: i32, %arg1: i32) -> (i32, i32) {
    %c0_i32 = arith.constant 0 : i32
    %c0_i32_0 = arith.constant 0 : i32
    %c0_i32_1 = arith.constant 0 : i32
    return %c0_i32, %c0_i32_0 : i32, i32
  }
  func.func @transform_4(%arg0: i32, %arg1: i32) -> (i32, i32) {
    %c0_i32 = arith.constant 0 : i32
    %c0_i32_0 = arith.constant 0 : i32
    %c0_i32_1 = arith.constant 0 : i32
    return %c0_i32, %c0_i32_0 : i32, i32
  }
  func.func @transform_5(%arg0: i32, %arg1: i32) -> (i32, i32) {
    %c0_i32 = arith.constant 0 : i32
    %c0_i32_0 = arith.constant 0 : i32
    %c0_i32_1 = arith.constant 0 : i32
    return %c0_i32, %c0_i32_0 : i32, i32
  }
  func.func @transform_6(%arg0: i32, %arg1: i32) -> (i32, i32) {
    %c0_i32 = arith.constant 0 : i32
    %c0_i32_0 = arith.constant 0 : i32
    return %c0_i32, %arg1 : i32, i32
  }
  func.func @transform_7(%arg0: i32, %arg1: i32) -> (i32, i32) {
    %c0_i32 = arith.constant 0 : i32
    %c0_i32_0 = arith.constant 0 : i32
    return %c0_i32, %arg1 : i32, i32
  }
  func.func @transform_8(%arg0: i32, %arg1: i32) -> (i32, i32) {
    %c0_i32 = arith.constant 0 : i32
    %c0_i32_0 = arith.constant 0 : i32
    return %arg1, %c0_i32 : i32, i32
  }
  func.func @transform_9(%arg0: i32, %arg1: i32) -> (i32, i32) {
    %c0_i32 = arith.constant 0 : i32
    %c0_i32_0 = arith.constant 0 : i32
    %c0_i32_1 = arith.constant 0 : i32
    return %c0_i32, %c0_i32_0 : i32, i32
  }
  func.func @transform_10(%arg0: i32, %arg1: i32) -> (i32, i32) {
    %c0_i32 = arith.constant 0 : i32
    %c0_i32_0 = arith.constant 0 : i32
    return %arg0, %c0_i32 : i32, i32
  }
}

</mosaic_0001>

<llo_original>
// kernel: tpu_custom_call.1
$region0: #{tpu_custom_call.1}
  #allocation0 [shape = 'u32[]', space=smem, size = 0x4, offset = 0x4, fixed_abs, tag = 'smem constant byte address 0x4 - core index']
  #allocation1 [shape = 'u32[144,128]{1,0:T(1,128)}', space=vmem, size = 0x12000, scoped, tag = 'internal scratch']
  #allocation2 [shape = 'f32[16,32]{1,0:T(8,128)}', space=vmem, size = 0x2000, scoped, tag = 'scratch operand']
  #allocation3 [shape = 'f32[16,32]{1,0:T(8,128)}', space=vmem, size = 0x2000, scoped, tag = 'scratch operand']
  %s0 = inlined_call_operand.hbm [shape: f32[16,32], index: 0, kind: input, shape index: {}]
  %s1 = inlined_call_operand.hbm [shape: f32[16,1], index: 1, kind: input, shape index: {}]
  %s2 = inlined_call_operand.hbm [shape: s8[2,1,8], index: 2, kind: input, shape index: {}]
  %s3 = inlined_call_operand.hbm [shape: bf16[32,96], index: 3, kind: input, shape index: {}]
  %s4 = inlined_call_operand.hbm [shape: f32[1,96], index: 4, kind: input, shape index: {}]
  %s5 = inlined_call_operand.hbm [shape: bf16[32,32], index: 5, kind: input, shape index: {}]
  %s6 = inlined_call_operand.hbm [shape: bf16[32,32], index: 6, kind: input, shape index: {}]
  %s7 = inlined_call_operand.hbm [shape: f32[1,32], index: 7, kind: input, shape index: {}]
  %s8 = inlined_call_operand.hbm [shape: bf16[32,32], index: 8, kind: input, shape index: {}]
  %s9 = inlined_call_operand.hbm [shape: f32[6,32], index: 9, kind: input, shape index: {}]
  %s10 = inlined_call_operand.hbm [shape: f32[16,32], index: 10, kind: output, shape index: {}]
  %s11 = sld [smem:[#allocation0]]
  $region98: #{tpu_custom_call.1} parent=0
    _
  %s13 = ssub.s32 1, %s11
  %s14 = scalar_select 0, %s13, %s11
  $region1: #{tpu_custom_call.1} parent=0
    #allocation4 [shape = 'u8[8192]{0}', space=vmem, size = 0x2000, scoped, tag = 'input window, operand 0, single buffered']
    #allocation5 [shape = 's32[1]{0}', space=sflag, size = 0x4, scoped, tag = 'scoped memory for tpu_custom_call.1']
    #allocation6 [shape = 's32[1]{0}', space=sflag, size = 0x4, scoped, tag = 'scoped memory for tpu_custom_call.1']
    #allocation7 [shape = 'u8[8192]{0}', space=vmem, size = 0x2000, scoped, tag = 'input window, operand 1, single buffered']
    #allocation8 [shape = 's32[1]{0}', space=sflag, size = 0x4, scoped, tag = 'scoped memory for tpu_custom_call.1']
    #allocation9 [shape = 'u8[1024]{0}', space=vmem, size = 0x400, scoped, tag = 'input window, operand 2, single buffered']
    #allocation10 [shape = 'u8[8192]{0}', space=vmem, size = 0x2000, scoped, tag = 'input window, operand 3, single buffered']
    #allocation11 [shape = 's32[1]{0}', space=sflag, size = 0x4, scoped, tag = 'scoped memory for tpu_custom_call.1']
    #allocation12 [shape = 'u8[512]{0}', space=vmem, size = 0x400, scoped, tag = 'input window, operand 4, single buffered']
    #allocation13 [shape = 'u8[8192]{0}', space=vmem, size = 0x2000, scoped, tag = 'input window, operand 5, single buffered']
    #allocation14 [shape = 's32[1]{0}', space=sflag, size = 0x4, scoped, tag = 'scoped memory for tpu_custom_call.1']
    #allocation15 [shape = 'u8[8192]{0}', space=vmem, size = 0x2000, scoped, tag = 'input window, operand 6, single buffered']
    #allocation16 [shape = 'u8[512]{0}', space=vmem, size = 0x400, scoped, tag = 'input window, operand 7, single buffered']
    #allocation17 [shape = 's32[1]{0}', space=sflag, size = 0x4, scoped, tag = 'scoped memory for tpu_custom_call.1']
    #allocation18 [shape = 'u8[8192]{0}', space=vmem, size = 0x2000, scoped, tag = 'input window, operand 8, single buffered']
    #allocation19 [shape = 'u8[4096]{0}', space=vmem, size = 0x1000, scoped, tag = 'input window, operand 9, single buffered']
    #allocation20 [shape = 's32[1]{0}', space=sflag, size = 0x4, scoped, tag = 'scoped memory for tpu_custom_call.1']
    #allocation21 [shape = 'u8[8192]{0}', space=vmem, size = 0x2000, scoped, tag = 'output window, operand 0, single buffered']
    %15 = vsyncpa [#allocation5], 0
    %16 = vsyncpa [#allocation8], 0
    %17 = vsyncpa [#allocation11], 0
    %18 = vsyncpa [#allocation14], 0
    %19 = vsyncpa [#allocation17], 0
    %20 = vsyncpa [#allocation20], 0
    %21 = vsyncpa [#allocation6], 0
    // Predicated region
    $region2: #{tpu_custom_call.1} parent=1 // pred_check
      _
    $region3: #{tpu_custom_call.1} parent=1 // pred_check_branch
      %23 = sbr.rel (0) target = $region5
    $region4: #{tpu_custom_call.1} parent=1 // pred_region
      %s25 = ssub.s32 256, 256
      %26 = vsyncadd [#allocation5], %s25
      %s27 = sshll.u32 [#allocation4], 4
      %s28 = int_to_ptr.vmem [resolvable:$true] %s27
      %33 = dma.hbm_to_vmem [thread:$0]  %s0, 256, %s28, [#allocation5], 128, 128, 8
    $region5: #{tpu_custom_call.1} parent=1 // pred_fallthru
      _
    // Predicated region
    $region6: #{tpu_custom_call.1} parent=1 // pred_check
      _
    $region7: #{tpu_custom_call.1} parent=1 // pred_check_branch
      %35 = sbr.rel (0) target = $region9
    $region8: #{tpu_custom_call.1} parent=1 // pred_region
      %s37 = ssub.s32 256, 256
      %38 = vsyncadd [#allocation8], %s37
      %s39 = sshll.u32 [#allocation7], 4
      %s40 = int_to_ptr.vmem [resolvable:$true] %s39
      %45 = dma.hbm_to_vmem [thread:$0]  %s1, 256, %s40, [#allocation8], 128, 128, 8
    $region9: #{tpu_custom_call.1} parent=1 // pred_fallthru
      _
    // Predicated region
    $region10: #{tpu_custom_call.1} parent=1 // pred_check
      _
    $region11: #{tpu_custom_call.1} parent=1 // pred_check_branch
      %47 = sbr.rel (0) target = $region13
    $region12: #{tpu_custom_call.1} parent=1 // pred_region
      %s49 = ssub.s32 32, 32
      %50 = vsyncadd [#allocation8], %s49
      %s51 = sshll.u32 [#allocation9], 4
      %s52 = int_to_ptr.vmem [resolvable:$true] %s51
      %57 = dma.hbm_to_vmem [thread:$0]  %s2, 32, %s52, [#allocation8], 16, 16, 1
    $region13: #{tpu_custom_call.1} parent=1 // pred_fallthru
      _
    // Predicated region
    $region14: #{tpu_custom_call.1} parent=1 // pred_check
      _
    $region15: #{tpu_custom_call.1} parent=1 // pred_check_branch
      %59 = sbr.rel (0) target = $region17
    $region16: #{tpu_custom_call.1} parent=1 // pred_region
      %s61 = ssub.s32 256, 256
      %62 = vsyncadd [#allocation11], %s61
      %s63 = sshll.u32 [#allocation10], 4
      %s64 = int_to_ptr.vmem [resolvable:$true] %s63
      %69 = dma.hbm_to_vmem [thread:$0]  %s3, 256, %s64, [#allocation11], 64, 64, 4
    $region17: #{tpu_custom_call.1} parent=1 // pred_fallthru
      _
    // Predicated region
    $region18: #{tpu_custom_call.1} parent=1 // pred_check
      _
    $region19: #{tpu_custom_call.1} parent=1 // pred_check_branch
      %71 = sbr.rel (0) target = $region21
    $region20: #{tpu_custom_call.1} parent=1 // pred_region
      %s73 = ssub.s32 16, 16
      %74 = vsyncadd [#allocation11], %s73
      %s76 = sshll.u32 [#allocation12], 4
      %s77 = int_to_ptr.vmem [resolvable:$true] %s76
      %79 = dma.hbm_to_vmem [thread:$0]  %s4, 16, %s77, [#allocation11]
    $region21: #{tpu_custom_call.1} parent=1 // pred_fallthru
      _
    // Predicated region
    $region22: #{tpu_custom_call.1} parent=1 // pred_check
      _
    $region23: #{tpu_custom_call.1} parent=1 // pred_check_branch
      %81 = sbr.rel (0) target = $region25
    $region24: #{tpu_custom_call.1} parent=1 // pred_region
      %s83 = ssub.s32 256, 256
      %84 = vsyncadd [#allocation14], %s83
      %s85 = sshll.u32 [#allocation13], 4
      %s86 = int_to_ptr.vmem [resolvable:$true] %s85
      %91 = dma.hbm_to_vmem [thread:$0]  %s5, 256, %s86, [#allocation14], 64, 64, 4
    $region25: #{tpu_custom_call.1} parent=1 // pred_fallthru
      _
    // Predicated region
    $region26: #{tpu_custom_call.1} parent=1 // pred_check
      _
    $region27: #{tpu_custom_call.1} parent=1 // pred_check_branch
      %93 = sbr.rel (0) target = $region29
    $region28: #{tpu_custom_call.1} parent=1 // pred_region
      %s95 = ssub.s32 256, 256
      %96 = vsyncadd [#allocation14], %s95
      %s97 = sshll.u32 [#allocation15], 4
      %s98 = int_to_ptr.vmem [resolvable:$true] %s97
      %103 = dma.hbm_to_vmem [thread:$0]  %s6, 256, %s98, [#allocation14], 64, 64, 4
    $region29: #{tpu_custom_call.1} parent=1 // pred_fallthru
      _
    // Predicated region
    $region30: #{tpu_custom_call.1} parent=1 // pred_check
      _
    $region31: #{tpu_custom_call.1} parent=1 // pred_check_branch
      %105 = sbr.rel (0) target = $region33
    $region32: #{tpu_custom_call.1} parent=1 // pred_region
      %s107 = ssub.s32 16, 16
      %108 = vsyncadd [#allocation17], %s107
      %s110 = sshll.u32 [#allocation16], 4
      %s111 = int_to_ptr.vmem [resolvable:$true] %s110
      %113 = dma.hbm_to_vmem [thread:$0]  %s7, 16, %s111, [#allocation17]
    $region33: #{tpu_custom_call.1} parent=1 // pred_fallthru
      _
    // Predicated region
    $region34: #{tpu_custom_call.1} parent=1 // pred_check
      _
    $region35: #{tpu_custom_call.1} parent=1 // pred_check_branch
      %115 = sbr.rel (0) target = $region37
    $region36: #{tpu_custom_call.1} parent=1 // pred_region
      %s117 = ssub.s32 256, 256
      %118 = vsyncadd [#allocation17], %s117
      %s119 = sshll.u32 [#allocation18], 4
      %s120 = int_to_ptr.vmem [resolvable:$true] %s119
      %125 = dma.hbm_to_vmem [thread:$0]  %s8, 256, %s120, [#allocation17], 64, 64, 4
    $region37: #{tpu_custom_call.1} parent=1 // pred_fallthru
      _
    // Predicated region
    $region38: #{tpu_custom_call.1} parent=1 // pred_check
      _
    $region39: #{tpu_custom_call.1} parent=1 // pred_check_branch
      %127 = sbr.rel (0) target = $region41
    $region40: #{tpu_custom_call.1} parent=1 // pred_region
      %s129 = ssub.s32 128, 128
      %130 = vsyncadd [#allocation20], %s129
      %s132 = sshll.u32 [#allocation19], 4
      %s133 = int_to_ptr.vmem [resolvable:$true] %s132
      %135 = dma.hbm_to_vmem [thread:$0]  %s9, 128, %s133, [#allocation20]
    $region41: #{tpu_custom_call.1} parent=1 // pred_fallthru
      _
    // Predicated region
    $region42: #{tpu_custom_call.1} parent=1 // pred_check
      _
    $region43: #{tpu_custom_call.1} parent=1 // pred_check_branch
      %137 = sbr.rel (0) target = $region45
    $region44: #{tpu_custom_call.1} parent=1 // pred_region
      %138 = dma.done [#allocation5], 256
    $region45: #{tpu_custom_call.1} parent=1 // pred_fallthru
      _
    // Predicated region
    $region46: #{tpu_custom_call.1} parent=1 // pred_check
      _
    $region47: #{tpu_custom_call.1} parent=1 // pred_check_branch
      %140 = sbr.rel (0) target = $region49
    $region48: #{tpu_custom_call.1} parent=1 // pred_region
      %141 = dma.done [#allocation8], 256
    $region49: #{tpu_custom_call.1} parent=1 // pred_fallthru
      _
    // Predicated region
    $region50: #{tpu_custom_call.1} parent=1 // pred_check
      _
    $region51: #{tpu_custom_call.1} parent=1 // pred_check_branch
      %143 = sbr.rel (0) target = $region53
    $region52: #{tpu_custom_call.1} parent=1 // pred_region
      %144 = dma.done [#allocation8], 32
    $region53: #{tpu_custom_call.1} parent=1 // pred_fallthru
      _
    // Predicated region
    $region54: #{tpu_custom_call.1} parent=1 // pred_check
      _
    $region55: #{tpu_custom_call.1} parent=1 // pred_check_branch
      %146 = sbr.rel (0) target = $region57
    $region56: #{tpu_custom_call.1} parent=1 // pred_region
      %147 = dma.done [#allocation11], 256
    $region57: #{tpu_custom_call.1} parent=1 // pred_fallthru
      _
    // Predicated region
    $region58: #{tpu_custom_call.1} parent=1 // pred_check
      _
    $region59: #{tpu_custom_call.1} parent=1 // pred_check_branch
      %149 = sbr.rel (0) target = $region61
    $region60: #{tpu_custom_call.1} parent=1 // pred_region
      %150 = dma.done [#allocation11], 16
    $region61: #{tpu_custom_call.1} parent=1 // pred_fallthru
      _
    // Predicated region
    $region62: #{tpu_custom_call.1} parent=1 // pred_check
      _
    $region63: #{tpu_custom_call.1} parent=1 // pred_check_branch
      %152 = sbr.rel (0) target = $region65
    $region64: #{tpu_custom_call.1} parent=1 // pred_region
      %153 = dma.done [#allocation14], 256
    $region65: #{tpu_custom_call.1} parent=1 // pred_fallthru
      _
    // Predicated region
    $region66: #{tpu_custom_call.1} parent=1 // pred_check
      _
    $region67: #{tpu_custom_call.1} parent=1 // pred_check_branch
      %155 = sbr.rel (0) target = $region69
    $region68: #{tpu_custom_call.1} parent=1 // pred_region
      %156 = dma.done [#allocation14], 256
    $region69: #{tpu_custom_call.1} parent=1 // pred_fallthru
      _
    // Predicated region
    $region70: #{tpu_custom_call.1} parent=1 // pred_check
      _
    $region71: #{tpu_custom_call.1} parent=1 // pred_check_branch
      %158 = sbr.rel (0) target = $region73
    $region72: #{tpu_custom_call.1} parent=1 // pred_region
      %159 = dma.done [#allocation17], 16
    $region73: #{tpu_custom_call.1} parent=1 // pred_fallthru
      _
    // Predicated region
    $region74: #{tpu_custom_call.1} parent=1 // pred_check
      _
    $region75: #{tpu_custom_call.1} parent=1 // pred_check_branch
      %161 = sbr.rel (0) target = $region77
    $region76: #{tpu_custom_call.1} parent=1 // pred_region
      %162 = dma.done [#allocation17], 256
    $region77: #{tpu_custom_call.1} parent=1 // pred_fallthru
      _
    // Predicated region
    $region78: #{tpu_custom_call.1} parent=1 // pred_check
      _
    $region79: #{tpu_custom_call.1} parent=1 // pred_check_branch
      %164 = sbr.rel (0) target = $region81
    $region80: #{tpu_custom_call.1} parent=1 // pred_region
      %165 = dma.done [#allocation20], 128
    $region81: #{tpu_custom_call.1} parent=1 // pred_fallthru
      _
    %p169 = scmp.eq.s32.totalorder 0, 0
    // Predicated region
    $region82: #{tpu_custom_call.1} parent=1 // pred_check
      %p170 = pneg %p169
    $region83: #{tpu_custom_call.1} parent=1 // pred_check_branch
      %172 = sbr.rel (%p170) target = $region85
    $region84: #{tpu_custom_call.1} parent=1 // pred_region
      %v173 = vld [vmem:[#allocation4] sm:$0xff]
      %v174 = vld [vmem:[#allocation4 + $0x8] sm:$0xff]
      %v175 = vld [vmem:[#allocation7] sm:$0xff]
      %v176 = vld [vmem:[#allocation7 + $0x8] sm:$0xff]
      %v177 = vld [vmem:[#allocation9] sm:$0x1]
      %v178 = vld [vmem:[#allocation9 + $0x1] sm:$0x1]
      %vm179 = vnez %v177
      %vm180 = vnez %v178
      %v181 = vpack.c.bf16 %v174, %v173
      %v182 = vld [vmem:[#allocation10] sm:$0xf]
      %v183 = vld [vmem:[#allocation10 + $0x4] sm:$0xf]
      %v184 = vld [vmem:[#allocation10 + $0x8] sm:$0xf]
      %v185 = vld [vmem:[#allocation10 + $0xc] sm:$0xf]
      %v186 = vld [vmem:[#allocation12] sm:$0x1]
      %v188 = vlaneseq
      %v189 = vshrl.u32 %v188, 7
      %v190 = vsub.s32 0, %v189
      %v191 = vrot.slane %v186, %v190
      %v197 = vunpack.c.l.b16 %v182
      %v198 = vunpack.c.l.b16 %v183
      %v199 = vunpack.c.l.b16 %v184
      %v200 = vunpack.c.l.b16 %v185
      %v201 = vpack.c.b16 %v198, %v197
      %v202 = vpack.c.b16 %v200, %v199
      %vm205 = vcmask 261120
      %v207 = vsel %vm205, %v181, 0
      %209 = vmatprep.subr.bf16.mxu0 0
      %210 = vmatpush1.bf16.msra.mxu0 %v201
      %211 = vmatprep.subr.bf16.mxu0 0
      %212 = vmatpush1.bf16.msra.mxu0 %v202
      %213 = vmatprep.subr.bf16.mxu0 0
      %214 = vmatpush1.bf16.msra.mxu0 0
      %215 = vmatprep.subr.bf16.mxu0 0
      %216 = vmatpush1.bf16.msra.mxu0 0
      %217 = vmatprep.subr.bf16.mxu0 0
      %218 = vmatpush1.bf16.msra.mxu0 0
      %219 = vmatprep.subr.bf16.mxu0 0
      %220 = vmatpush1.bf16.msra.mxu0 0
      %221 = vmatprep.subr.bf16.mxu0 0
      %222 = vmatpush1.bf16.msra.mxu0 0
      %223 = vmatprep.subr.bf16.mxu0 0
      %224 = vmatpush1.bf16.msra.mxu0 0
      %225 = vmatprep.subr.bf16.mxu0 0
      %226 = vmatpush1.bf16.msra.mxu0 0
      %227 = vmatprep.subr.bf16.mxu0 0
      %228 = vmatpush1.bf16.msra.mxu0 0
      %229 = vmatprep.subr.bf16.mxu0 0
      %230 = vmatpush1.bf16.msra.mxu0 0
      %231 = vmatprep.subr.bf16.mxu0 0
      %232 = vmatpush1.bf16.msra.mxu0 0
      %233 = vmatprep.subr.bf16.mxu0 0
      %234 = vmatpush1.bf16.msra.mxu0 0
      %235 = vmatprep.subr.bf16.mxu0 0
      %236 = vmatpush1.bf16.msra.mxu0 0
      %237 = vmatprep.subr.bf16.mxu0 0
      %238 = vmatpush1.bf16.msra.mxu0 0
      %239 = vmatprep.subr.bf16.mxu0 0
      %240 = vmatpush1.bf16.msra.mxu0 0
      %241 = vmatprep.mubr.bf16.mxu0 0
      %242 = vmatmul.mubr.bf16.gmra.mrb[0].mxu0 %v207
      %v243 = vpop.f32.mrb[0].mxu0
      %v244 = vadd.f32 %v191, %v243
      %v245 = vpop.f32.mrb[0].mxu0
      %v246 = vpop.f32.mrb[0].mxu0
      %v247 = vadd.f32 %v191, %v246
      %v248 = vpop.f32.mrb[0].mxu0
      %249 = vdwg.mxu0
      %v250 = vmul.f32 %v244, 0.35355338
      %v251 = vmul.f32 %v247, 0.35355338
      %254 = vrot.lane.b32.xlu0 %v250, 120
      %v255 = vpop.permute.xlu0 %254
      %256 = vrot.lane.b32.xlu0 %v251, 120
      %v257 = vpop.permute.xlu0 %256
      %260 = vrot.lane.b32.xlu0 %v250, 112
      %v261 = vpop.permute.xlu0 %260
      %262 = vrot.lane.b32.xlu0 %v251, 112
      %v263 = vpop.permute.xlu0 %262
      %266 = vrot.lane.b32.xlu0 %v250, 104
      %v267 = vpop.permute.xlu0 %266
      %268 = vrot.lane.b32.xlu0 %v251, 104
      %v269 = vpop.permute.xlu0 %268
      %v272 = vpack.c.bf16 %v250, %v250
      %v273 = vpack.c.bf16 %v251, %v251
      %v274 = vpack.c.bf16 %v255, %v255
      %v275 = vpack.c.bf16 %v257, %v257
      %v276 = vpack.c.bf16 %v261, %v261
      %v277 = vpack.c.bf16 %v263, %v263
      %v278 = vpack.c.bf16 %v267, %v267
      %v279 = vpack.c.bf16 %v269, %v269
      %282 = vrot.lane.b32.xlu0 %v244, 120
      %v283 = vpop.permute.xlu0 %282
      %284 = vrot.lane.b32.xlu0 %v247, 120
      %v285 = vpop.permute.xlu0 %284
      %288 = vrot.lane.b32.xlu0 %v244, 112
      %v289 = vpop.permute.xlu0 %288
      %290 = vrot.lane.b32.xlu0 %v247, 112
      %v291 = vpop.permute.xlu0 %290
      %294 = vrot.lane.b32.xlu0 %v244, 104
      %v295 = vpop.permute.xlu0 %294
      %296 = vrot.lane.b32.xlu0 %v247, 104
      %v297 = vpop.permute.xlu0 %296
      %v300 = vpack.c.bf16 %v244, %v244
      %v301 = vpack.c.bf16 %v247, %v247
      %v302 = vpack.c.bf16 %v283, %v283
      %v303 = vpack.c.bf16 %v285, %v285
      %v304 = vpack.c.bf16 %v289, %v289
      %v305 = vpack.c.bf16 %v291, %v291
      %v306 = vpack.c.bf16 %v295, %v295
      %v307 = vpack.c.bf16 %v297, %v297
      %309 = vrot.lane.b32.xlu0 %v300, 96
      %v310 = vpop.permute.xlu0 %309
      %vm311 = vcmask 64512
      %v313 = vsel %vm311, %v272, 0
      %v316 = vsel %vm311, %v310, 0
      %318 = vmatprep.subr.bf16.mxu0 0
      %319 = vmatpush1.bf16.xpose.msra.mxu0 %v316
      %320 = vmatprep.subr.bf16.mxu0 0
      %321 = vmatpush1.bf16.xpose.msra.mxu0 0
      %322 = vmatprep.subr.bf16.mxu0 0
      %323 = vmatpush1.bf16.xpose.msra.mxu0 0
      %324 = vmatprep.subr.bf16.mxu0 0
      %325 = vmatpush1.bf16.xpose.msra.mxu0 0
      %326 = vmatprep.subr.bf16.mxu0 0
      %327 = vmatpush1.bf16.xpose.msra.mxu0 0
      %328 = vmatprep.subr.bf16.mxu0 0
      %329 = vmatpush1.bf16.xpose.msra.mxu0 0
      %330 = vmatprep.subr.bf16.mxu0 0
      %331 = vmatpush1.bf16.xpose.msra.mxu0 0
      %332 = vmatprep.subr.bf16.mxu0 0
      %333 = vmatpush1.bf16.xpose.msra.mxu0 0
      %334 = vmatprep.subr.bf16.mxu0 0
      %335 = vmatpush1.bf16.xpose.msra.mxu0 0
      %336 = vmatprep.subr.bf16.mxu0 0
      %337 = vmatpush1.bf16.xpose.msra.mxu0 0
      %338 = vmatprep.subr.bf16.mxu0 0
      %339 = vmatpush1.bf16.xpose.msra.mxu0 0
      %340 = vmatprep.subr.bf16.mxu0 0
      %341 = vmatpush1.bf16.xpose.msra.mxu0 0
      %342 = vmatprep.subr.bf16.mxu0 0
      %343 = vmatpush1.bf16.xpose.msra.mxu0 0
      %344 = vmatprep.subr.bf16.mxu0 0
      %345 = vmatpush1.bf16.xpose.msra.mxu0 0
      %346 = vmatprep.subr.bf16.mxu0 0
      %347 = vmatpush1.bf16.xpose.msra.mxu0 0
      %348 = vmatprep.subr.bf16.mxu0 0
      %349 = vmatpush1.bf16.xpose.msra.mxu0 0
      %350 = vmatprep.mubr.bf16.mxu0 0
      %351 = vmatmul.mubr.bf16.gmra.mrb[0].mxu0 %v313
      %v352 = vpop.f32.mrb[0].mxu0
      %v353 = vadd.f32 0.0, %v352
      %v354 = vpop.f32.mrb[0].mxu0
      %v355 = vpop.f32.mrb[0].mxu0
      %v356 = vpop.f32.mrb[0].mxu0
      %357 = vdwg.mxu0
      %359 = vrot.lane.b32.xlu0 %v301, 96
      %v360 = vpop.permute.xlu0 %359
      %v362 = vsel %vm311, %v273, 0
      %v365 = vsel %vm311, %v360, 0
      %367 = vmatprep.subr.bf16.mxu0 0
      %368 = vmatpush1.bf16.xpose.msra.mxu0 %v365
      %369 = vmatprep.subr.bf16.mxu0 0
      %370 = vmatpush1.bf16.xpose.msra.mxu0 0
      %371 = vmatprep.subr.bf16.mxu0 0
      %372 = vmatpush1.bf16.xpose.msra.mxu0 0
      %373 = vmatprep.subr.bf16.mxu0 0
      %374 = vmatpush1.bf16.xpose.msra.mxu0 0
      %375 = vmatprep.subr.bf16.mxu0 0
      %376 = vmatpush1.bf16.xpose.msra.mxu0 0
      %377 = vmatprep.subr.bf16.mxu0 0
      %378 = vmatpush1.bf16.xpose.msra.mxu0 0
      %379 = vmatprep.subr.bf16.mxu0 0
      %380 = vmatpush1.bf16.xpose.msra.mxu0 0
      %381 = vmatprep.subr.bf16.mxu0 0
      %382 = vmatpush1.bf16.xpose.msra.mxu0 0
      %383 = vmatprep.subr.bf16.mxu0 0
      %384 = vmatpush1.bf16.xpose.msra.mxu0 0
      %385 = vmatprep.subr.bf16.mxu0 0
      %386 = vmatpush1.bf16.xpose.msra.mxu0 0
      %387 = vmatprep.subr.bf16.mxu0 0
      %388 = vmatpush1.bf16.xpose.msra.mxu0 0
      %389 = vmatprep.subr.bf16.mxu0 0
      %390 = vmatpush1.bf16.xpose.msra.mxu0 0
      %391 = vmatprep.subr.bf16.mxu0 0
      %392 = vmatpush1.bf16.xpose.msra.mxu0 0
      %393 = vmatprep.subr.bf16.mxu0 0
      %394 = vmatpush1.bf16.xpose.msra.mxu0 0
      %395 = vmatprep.subr.bf16.mxu0 0
      %396 = vmatpush1.bf16.xpose.msra.mxu0 0
      %397 = vmatprep.subr.bf16.mxu0 0
      %398 = vmatpush1.bf16.xpose.msra.mxu0 0
      %399 = vmatprep.mubr.bf16.mxu0 0
      %400 = vmatmul.mubr.bf16.gmra.mrb[0].mxu0 %v362
      %v401 = vpop.f32.mrb[0].mxu0
      %v402 = vadd.f32 0.0, %v401
      %v403 = vpop.f32.mrb[0].mxu0
      %v404 = vpop.f32.mrb[0].mxu0
      %v405 = vpop.f32.mrb[0].mxu0
      %406 = vdwg.mxu0
      %408 = vrot.lane.b32.xlu0 %v302, 96
      %v409 = vpop.permute.xlu0 %408
      %v411 = vsel %vm311, %v274, 0
      %v414 = vsel %vm311, %v409, 0
      %416 = vmatprep.subr.bf16.mxu0 0
      %417 = vmatpush1.bf16.xpose.msra.mxu0 %v414
      %418 = vmatprep.subr.bf16.mxu0 0
      %419 = vmatpush1.bf16.xpose.msra.mxu0 0
      %420 = vmatprep.subr.bf16.mxu0 0
      %421 = vmatpush1.bf16.xpose.msra.mxu0 0
      %422 = vmatprep.subr.bf16.mxu0 0
      %423 = vmatpush1.bf16.xpose.msra.mxu0 0
      %424 = vmatprep.subr.bf16.mxu0 0
      %425 = vmatpush1.bf16.xpose.msra.mxu0 0
      %426 = vmatprep.subr.bf16.mxu0 0
      %427 = vmatpush1.bf16.xpose.msra.mxu0 0
      %428 = vmatprep.subr.bf16.mxu0 0
      %429 = vmatpush1.bf16.xpose.msra.mxu0 0
      %430 = vmatprep.subr.bf16.mxu0 0
      %431 = vmatpush1.bf16.xpose.msra.mxu0 0
      %432 = vmatprep.subr.bf16.mxu0 0
      %433 = vmatpush1.bf16.xpose.msra.mxu0 0
      %434 = vmatprep.subr.bf16.mxu0 0
      %435 = vmatpush1.bf16.xpose.msra.mxu0 0
      %436 = vmatprep.subr.bf16.mxu0 0
      %437 = vmatpush1.bf16.xpose.msra.mxu0 0
      %438 = vmatprep.subr.bf16.mxu0 0
      %439 = vmatpush1.bf16.xpose.msra.mxu0 0
      %440 = vmatprep.subr.bf16.mxu0 0
      %441 = vmatpush1.bf16.xpose.msra.mxu0 0
      %442 = vmatprep.subr.bf16.mxu0 0
      %443 = vmatpush1.bf16.xpose.msra.mxu0 0
      %444 = vmatprep.subr.bf16.mxu0 0
      %445 = vmatpush1.bf16.xpose.msra.mxu0 0
      %446 = vmatprep.subr.bf16.mxu0 0
      %447 = vmatpush1.bf16.xpose.msra.mxu0 0
      %448 = vmatprep.mubr.bf16.mxu0 0
      %449 = vmatmul.mubr.bf16.gmra.mrb[0].mxu0 %v411
      %v450 = vpop.f32.mrb[0].mxu0
      %v451 = vadd.f32 0.0, %v450
      %v452 = vpop.f32.mrb[0].mxu0
      %v453 = vpop.f32.mrb[0].mxu0
      %v454 = vpop.f32.mrb[0].mxu0
      %455 = vdwg.mxu0
      %457 = vrot.lane.b32.xlu0 %v303, 96
      %v458 = vpop.permute.xlu0 %457
      %v460 = vsel %vm311, %v275, 0
      %v463 = vsel %vm311, %v458, 0
      %465 = vmatprep.subr.bf16.mxu0 0
      %466 = vmatpush1.bf16.xpose.msra.mxu0 %v463
      %467 = vmatprep.subr.bf16.mxu0 0
      %468 = vmatpush1.bf16.xpose.msra.mxu0 0
      %469 = vmatprep.subr.bf16.mxu0 0
      %470 = vmatpush1.bf16.xpose.msra.mxu0 0
      %471 = vmatprep.subr.bf16.mxu0 0
      %472 = vmatpush1.bf16.xpose.msra.mxu0 0
      %473 = vmatprep.subr.bf16.mxu0 0
      %474 = vmatpush1.bf16.xpose.msra.mxu0 0
      %475 = vmatprep.subr.bf16.mxu0 0
      %476 = vmatpush1.bf16.xpose.msra.mxu0 0
      %477 = vmatprep.subr.bf16.mxu0 0
      %478 = vmatpush1.bf16.xpose.msra.mxu0 0
      %479 = vmatprep.subr.bf16.mxu0 0
      %480 = vmatpush1.bf16.xpose.msra.mxu0 0
      %481 = vmatprep.subr.bf16.mxu0 0
      %482 = vmatpush1.bf16.xpose.msra.mxu0 0
      %483 = vmatprep.subr.bf16.mxu0 0
      %484 = vmatpush1.bf16.xpose.msra.mxu0 0
      %485 = vmatprep.subr.bf16.mxu0 0
      %486 = vmatpush1.bf16.xpose.msra.mxu0 0
      %487 = vmatprep.subr.bf16.mxu0 0
      %488 = vmatpush1.bf16.xpose.msra.mxu0 0
      %489 = vmatprep.subr.bf16.mxu0 0
      %490 = vmatpush1.bf16.xpose.msra.mxu0 0
      %491 = vmatprep.subr.bf16.mxu0 0
      %492 = vmatpush1.bf16.xpose.msra.mxu0 0
      %493 = vmatprep.subr.bf16.mxu0 0
      %494 = vmatpush1.bf16.xpose.msra.mxu0 0
      %495 = vmatprep.subr.bf16.mxu0 0
      %496 = vmatpush1.bf16.xpose.msra.mxu0 0
      %497 = vmatprep.mubr.bf16.mxu0 0
      %498 = vmatmul.mubr.bf16.gmra.mrb[0].mxu0 %v460
      %v499 = vpop.f32.mrb[0].mxu0
      %v500 = vadd.f32 0.0, %v499
      %v501 = vpop.f32.mrb[0].mxu0
      %v502 = vpop.f32.mrb[0].mxu0
      %v503 = vpop.f32.mrb[0].mxu0
      %504 = vdwg.mxu0
      %506 = vrot.lane.b32.xlu0 %v304, 96
      %v507 = vpop.permute.xlu0 %506
      %v509 = vsel %vm311, %v276, 0
      %v512 = vsel %vm311, %v507, 0
      %514 = vmatprep.subr.bf16.mxu0 0
      %515 = vmatpush1.bf16.xpose.msra.mxu0 %v512
      %516 = vmatprep.subr.bf16.mxu0 0
      %517 = vmatpush1.bf16.xpose.msra.mxu0 0
      %518 = vmatprep.subr.bf16.mxu0 0
      %519 = vmatpush1.bf16.xpose.msra.mxu0 0
      %520 = vmatprep.subr.bf16.mxu0 0
      %521 = vmatpush1.bf16.xpose.msra.mxu0 0
      %522 = vmatprep.subr.bf16.mxu0 0
      %523 = vmatpush1.bf16.xpose.msra.mxu0 0
      %524 = vmatprep.subr.bf16.mxu0 0
      %525 = vmatpush1.bf16.xpose.msra.mxu0 0
      %526 = vmatprep.subr.bf16.mxu0 0
      %527 = vmatpush1.bf16.xpose.msra.mxu0 0
      %528 = vmatprep.subr.bf16.mxu0 0
      %529 = vmatpush1.bf16.xpose.msra.mxu0 0
      %530 = vmatprep.subr.bf16.mxu0 0
      %531 = vmatpush1.bf16.xpose.msra.mxu0 0
      %532 = vmatprep.subr.bf16.mxu0 0
      %533 = vmatpush1.bf16.xpose.msra.mxu0 0
      %534 = vmatprep.subr.bf16.mxu0 0
      %535 = vmatpush1.bf16.xpose.msra.mxu0 0
      %536 = vmatprep.subr.bf16.mxu0 0
      %537 = vmatpush1.bf16.xpose.msra.mxu0 0
      %538 = vmatprep.subr.bf16.mxu0 0
      %539 = vmatpush1.bf16.xpose.msra.mxu0 0
      %540 = vmatprep.subr.bf16.mxu0 0
      %541 = vmatpush1.bf16.xpose.msra.mxu0 0
      %542 = vmatprep.subr.bf16.mxu0 0
      %543 = vmatpush1.bf16.xpose.msra.mxu0 0
      %544 = vmatprep.subr.bf16.mxu0 0
      %545 = vmatpush1.bf16.xpose.msra.mxu0 0
      %546 = vmatprep.mubr.bf16.mxu0 0
      %547 = vmatmul.mubr.bf16.gmra.mrb[0].mxu0 %v509
      %v548 = vpop.f32.mrb[0].mxu0
      %v549 = vadd.f32 0.0, %v548
      %v550 = vpop.f32.mrb[0].mxu0
      %v551 = vpop.f32.mrb[0].mxu0
      %v552 = vpop.f32.mrb[0].mxu0
      %553 = vdwg.mxu0
      %555 = vrot.lane.b32.xlu0 %v305, 96
      %v556 = vpop.permute.xlu0 %555
      %v558 = vsel %vm311, %v277, 0
      %v561 = vsel %vm311, %v556, 0
      %563 = vmatprep.subr.bf16.mxu0 0
      %564 = vmatpush1.bf16.xpose.msra.mxu0 %v561
      %565 = vmatprep.subr.bf16.mxu0 0
      %566 = vmatpush1.bf16.xpose.msra.mxu0 0
      %567 = vmatprep.subr.bf16.mxu0 0
      %568 = vmatpush1.bf16.xpose.msra.mxu0 0
      %569 = vmatprep.subr.bf16.mxu0 0
      %570 = vmatpush1.bf16.xpose.msra.mxu0 0
      %571 = vmatprep.subr.bf16.mxu0 0
      %572 = vmatpush1.bf16.xpose.msra.mxu0 0
      %573 = vmatprep.subr.bf16.mxu0 0
      %574 = vmatpush1.bf16.xpose.msra.mxu0 0
      %575 = vmatprep.subr.bf16.mxu0 0
      %576 = vmatpush1.bf16.xpose.msra.mxu0 0
      %577 = vmatprep.subr.bf16.mxu0 0
      %578 = vmatpush1.bf16.xpose.msra.mxu0 0
      %579 = vmatprep.subr.bf16.mxu0 0
      %580 = vmatpush1.bf16.xpose.msra.mxu0 0
      %581 = vmatprep.subr.bf16.mxu0 0
      %582 = vmatpush1.bf16.xpose.msra.mxu0 0
      %583 = vmatprep.subr.bf16.mxu0 0
      %584 = vmatpush1.bf16.xpose.msra.mxu0 0
      %585 = vmatprep.subr.bf16.mxu0 0
      %586 = vmatpush1.bf16.xpose.msra.mxu0 0
      %587 = vmatprep.subr.bf16.mxu0 0
      %588 = vmatpush1.bf16.xpose.msra.mxu0 0
      %589 = vmatprep.subr.bf16.mxu0 0
      %590 = vmatpush1.bf16.xpose.msra.mxu0 0
      %591 = vmatprep.subr.bf16.mxu0 0
      %592 = vmatpush1.bf16.xpose.msra.mxu0 0
      %593 = vmatprep.subr.bf16.mxu0 0
      %594 = vmatpush1.bf16.xpose.msra.mxu0 0
      %595 = vmatprep.mubr.bf16.mxu0 0
      %596 = vmatmul.mubr.bf16.gmra.mrb[0].mxu0 %v558
      %v597 = vpop.f32.mrb[0].mxu0
      %v598 = vadd.f32 0.0, %v597
      %v599 = vpop.f32.mrb[0].mxu0
      %v600 = vpop.f32.mrb[0].mxu0
      %v601 = vpop.f32.mrb[0].mxu0
      %602 = vdwg.mxu0
      %604 = vrot.lane.b32.xlu0 %v306, 96
      %v605 = vpop.permute.xlu0 %604
      %v607 = vsel %vm311, %v278, 0
      %v610 = vsel %vm311, %v605, 0
      %612 = vmatprep.subr.bf16.mxu0 0
      %613 = vmatpush1.bf16.xpose.msra.mxu0 %v610
      %614 = vmatprep.subr.bf16.mxu0 0
      %615 = vmatpush1.bf16.xpose.msra.mxu0 0
      %616 = vmatprep.subr.bf16.mxu0 0
      %617 = vmatpush1.bf16.xpose.msra.mxu0 0
      %618 = vmatprep.subr.bf16.mxu0 0
      %619 = vmatpush1.bf16.xpose.msra.mxu0 0
      %620 = vmatprep.subr.bf16.mxu0 0
      %621 = vmatpush1.bf16.xpose.msra.mxu0 0
      %622 = vmatprep.subr.bf16.mxu0 0
      %623 = vmatpush1.bf16.xpose.msra.mxu0 0
      %624 = vmatprep.subr.bf16.mxu0 0
      %625 = vmatpush1.bf16.xpose.msra.mxu0 0
      %626 = vmatprep.subr.bf16.mxu0 0
      %627 = vmatpush1.bf16.xpose.msra.mxu0 0
      %628 = vmatprep.subr.bf16.mxu0 0
      %629 = vmatpush1.bf16.xpose.msra.mxu0 0
      %630 = vmatprep.subr.bf16.mxu0 0
      %631 = vmatpush1.bf16.xpose.msra.mxu0 0
      %632 = vmatprep.subr.bf16.mxu0 0
      %633 = vmatpush1.bf16.xpose.msra.mxu0 0
      %634 = vmatprep.subr.bf16.mxu0 0
      %635 = vmatpush1.bf16.xpose.msra.mxu0 0
      %636 = vmatprep.subr.bf16.mxu0 0
      %637 = vmatpush1.bf16.xpose.msra.mxu0 0
      %638 = vmatprep.subr.bf16.mxu0 0
      %639 = vmatpush1.bf16.xpose.msra.mxu0 0
      %640 = vmatprep.subr.bf16.mxu0 0
      %641 = vmatpush1.bf16.xpose.msra.mxu0 0
      %642 = vmatprep.subr.bf16.mxu0 0
      %643 = vmatpush1.bf16.xpose.msra.mxu0 0
      %644 = vmatprep.mubr.bf16.mxu0 0
      %645 = vmatmul.mubr.bf16.gmra.mrb[0].mxu0 %v607
      %v646 = vpop.f32.mrb[0].mxu0
      %v647 = vadd.f32 0.0, %v646
      %v648 = vpop.f32.mrb[0].mxu0
      %v649 = vpop.f32.mrb[0].mxu0
      %v650 = vpop.f32.mrb[0].mxu0
      %651 = vdwg.mxu0
      %653 = vrot.lane.b32.xlu0 %v307, 96
      %v654 = vpop.permute.xlu0 %653
      %v656 = vsel %vm311, %v279, 0
      %v659 = vsel %vm311, %v654, 0
      %661 = vmatprep.subr.bf16.mxu0 0
      %662 = vmatpush1.bf16.xpose.msra.mxu0 %v659
      %663 = vmatprep.subr.bf16.mxu0 0
      %664 = vmatpush1.bf16.xpose.msra.mxu0 0
      %665 = vmatprep.subr.bf16.mxu0 0
      %666 = vmatpush1.bf16.xpose.msra.mxu0 0
      %667 = vmatprep.subr.bf16.mxu0 0
      %668 = vmatpush1.bf16.xpose.msra.mxu0 0
      %669 = vmatprep.subr.bf16.mxu0 0
      %670 = vmatpush1.bf16.xpose.msra.mxu0 0
      %671 = vmatprep.subr.bf16.mxu0 0
      %672 = vmatpush1.bf16.xpose.msra.mxu0 0
      %673 = vmatprep.subr.bf16.mxu0 0
      %674 = vmatpush1.bf16.xpose.msra.mxu0 0
      %675 = vmatprep.subr.bf16.mxu0 0
      %676 = vmatpush1.bf16.xpose.msra.mxu0 0
      %677 = vmatprep.subr.bf16.mxu0 0
      %678 = vmatpush1.bf16.xpose.msra.mxu0 0
      %679 = vmatprep.subr.bf16.mxu0 0
      %680 = vmatpush1.bf16.xpose.msra.mxu0 0
      %681 = vmatprep.subr.bf16.mxu0 0
      %682 = vmatpush1.bf16.xpose.msra.mxu0 0
      %683 = vmatprep.subr.bf16.mxu0 0
      %684 = vmatpush1.bf16.xpose.msra.mxu0 0
      %685 = vmatprep.subr.bf16.mxu0 0
      %686 = vmatpush1.bf16.xpose.msra.mxu0 0
      %687 = vmatprep.subr.bf16.mxu0 0
      %688 = vmatpush1.bf16.xpose.msra.mxu0 0
      %689 = vmatprep.subr.bf16.mxu0 0
      %690 = vmatpush1.bf16.xpose.msra.mxu0 0
      %691 = vmatprep.subr.bf16.mxu0 0
      %692 = vmatpush1.bf16.xpose.msra.mxu0 0
      %693 = vmatprep.mubr.bf16.mxu0 0
      %694 = vmatmul.mubr.bf16.gmra.mrb[0].mxu0 %v656
      %v695 = vpop.f32.mrb[0].mxu0
      %v696 = vadd.f32 0.0, %v695
      %v697 = vpop.f32.mrb[0].mxu0
      %v698 = vpop.f32.mrb[0].mxu0
      %v699 = vpop.f32.mrb[0].mxu0
      %700 = vdwg.mxu0
      %v701 = vsel %vm179, 16843009, 0
      %v702 = vsel %vm180, 16843009, 0
      %v703 = vunpack.c.0.s8 %v701
      %v704 = vunpack.c.0.s8 %v702
      %vm705 = vcmp.ne.s32.totalorder %v703, 0
      %vm706 = vcmp.ne.s32.totalorder %v704, 0
      %v707 = vsel %vm705, 1, 0
      %v708 = vsel %vm706, 1, 0
      %v709 = vlaneseq
      %v710 = vshrl.u32 %v709, 7
      %v711 = vsub.s32 0, %v710
      %v712 = vrot.slane %v707, %v711
      %v713 = vlaneseq
      %v714 = vshrl.u32 %v713, 7
      %v715 = vsub.s32 0, %v714
      %v716 = vrot.slane %v708, %v715
      %vm717 = vcmp.eq.s32.totalorder %v712, 1
      %vm718 = vcmp.eq.s32.totalorder %v716, 1
      %v719 = vsel %vm717, -1e+09, %v353
      %v720 = vsel %vm718, -1e+09, %v402
      %v721 = vsel %vm717, -1e+09, %v451
      %v722 = vsel %vm718, -1e+09, %v500
      %v723 = vsel %vm717, -1e+09, %v549
      %v724 = vsel %vm718, -1e+09, %v598
      %v725 = vsel %vm717, -1e+09, %v647
      %v726 = vsel %vm718, -1e+09, %v696
      %v727 = vsel %vm311, %v719, -inf
      %728 = vmax.xlane.f32.xlu0 %v727
      %v729 = vpop.xlane.xlu0 %728
      %v730 = vsel %vm311, %v720, -inf
      %731 = vmax.xlane.f32.xlu0 %v730
      %v732 = vpop.xlane.xlu0 %731
      %v733 = vsel %vm311, %v721, -inf
      %734 = vmax.xlane.f32.xlu0 %v733
      %v735 = vpop.xlane.xlu0 %734
      %v736 = vsel %vm311, %v722, -inf
      %737 = vmax.xlane.f32.xlu0 %v736
      %v738 = vpop.xlane.xlu0 %737
      %v739 = vsel %vm311, %v723, -inf
      %740 = vmax.xlane.f32.xlu0 %v739
      %v741 = vpop.xlane.xlu0 %740
      %v742 = vsel %vm311, %v724, -inf
      %743 = vmax.xlane.f32.xlu0 %v742
      %v744 = vpop.xlane.xlu0 %743
      %v745 = vsel %vm311, %v725, -inf
      %746 = vmax.xlane.f32.xlu0 %v745
      %v747 = vpop.xlane.xlu0 %746
      %v748 = vsel %vm311, %v726, -inf
      %749 = vmax.xlane.f32.xlu0 %v748
      %v750 = vpop.xlane.xlu0 %749
      %v751 = vsub.f32 %v719, %v729
      %v752 = vsub.f32 %v720, %v732
      %v753 = vsub.f32 %v721, %v735
      %v754 = vsub.f32 %v722, %v738
      %v755 = vsub.f32 %v723, %v741
      %v756 = vsub.f32 %v724, %v744
      %v757 = vsub.f32 %v725, %v747
      %v758 = vsub.f32 %v726, %v750
      %v759 = vmul.f32 %v751, 1.442695
      %v760 = vpow.pop %v759
      %v761 = vmul.f32 %v752, 1.442695
      %v762 = vpow.pop %v761
      %v763 = vmul.f32 %v753, 1.442695
      %v764 = vpow.pop %v763
      %v765 = vmul.f32 %v754, 1.442695
      %v766 = vpow.pop %v765
      %v767 = vmul.f32 %v755, 1.442695
      %v768 = vpow.pop %v767
      %v769 = vmul.f32 %v756, 1.442695
      %v770 = vpow.pop %v769
      %v771 = vmul.f32 %v757, 1.442695
      %v772 = vpow.pop %v771
      %v773 = vmul.f32 %v758, 1.442695
      %v774 = vpow.pop %v773
      %v775 = vsel %vm311, %v760, 0.0
      %776 = vadd.xlane.f32.xlu0 %v775
      %v777 = vpop.xlane.xlu0 %776
      %v778 = vsel %vm311, %v762, 0.0
      %779 = vadd.xlane.f32.xlu0 %v778
      %v780 = vpop.xlane.xlu0 %779
      %v781 = vsel %vm311, %v764, 0.0
      %782 = vadd.xlane.f32.xlu0 %v781
      %v783 = vpop.xlane.xlu0 %782
      %v784 = vsel %vm311, %v766, 0.0
      %785 = vadd.xlane.f32.xlu0 %v784
      %v786 = vpop.xlane.xlu0 %785
      %v787 = vsel %vm311, %v768, 0.0
      %788 = vadd.xlane.f32.xlu0 %v787
      %v789 = vpop.xlane.xlu0 %788
      %v790 = vsel %vm311, %v770, 0.0
      %791 = vadd.xlane.f32.xlu0 %v790
      %v792 = vpop.xlane.xlu0 %791
      %v793 = vsel %vm311, %v772, 0.0
      %794 = vadd.xlane.f32.xlu0 %v793
      %v795 = vpop.xlane.xlu0 %794
      %v796 = vsel %vm311, %v774, 0.0
      %797 = vadd.xlane.f32.xlu0 %v796
      %v798 = vpop.xlane.xlu0 %797
      %v799 = vrcp.pop %v777
      %v800 = vmul.f32 %v760, %v799
      %v801 = vrcp.pop %v780
      %v802 = vmul.f32 %v762, %v801
      %v803 = vrcp.pop %v783
      %v804 = vmul.f32 %v764, %v803
      %v805 = vrcp.pop %v786
      %v806 = vmul.f32 %v766, %v805
      %v807 = vrcp.pop %v789
      %v808 = vmul.f32 %v768, %v807
      %v809 = vrcp.pop %v792
      %v810 = vmul.f32 %v770, %v809
      %v811 = vrcp.pop %v795
      %v812 = vmul.f32 %v772, %v811
      %v813 = vrcp.pop %v798
      %v814 = vmul.f32 %v774, %v813
      %v815 = vpack.c.bf16 %v800, %v800
      %v816 = vpack.c.bf16 %v802, %v802
      %v817 = vpack.c.bf16 %v804, %v804
      %v818 = vpack.c.bf16 %v806, %v806
      %v819 = vpack.c.bf16 %v808, %v808
      %v820 = vpack.c.bf16 %v810, %v810
      %v821 = vpack.c.bf16 %v812, %v812
      %v822 = vpack.c.bf16 %v814, %v814
      %823 = vrot.lane.b32.xlu0 %v300, 64
      %v824 = vpop.permute.xlu0 %823
      %v826 = vsel %vm311, %v815, 0
      %vm828 = vcmask 1043456
      %v830 = vsel %vm828, %v824, 0
      %832 = vmatprep.subr.bf16.mxu0 0
      %833 = vmatpush1.bf16.msra.mxu0 %v830
      %834 = vmatprep.subr.bf16.mxu0 0
      %835 = vmatpush1.bf16.msra.mxu0 0
      %836 = vmatprep.subr.bf16.mxu0 0
      %837 = vmatpush1.bf16.msra.mxu0 0
      %838 = vmatprep.subr.bf16.mxu0 0
      %839 = vmatpush1.bf16.msra.mxu0 0
      %840 = vmatprep.subr.bf16.mxu0 0
      %841 = vmatpush1.bf16.msra.mxu0 0
      %842 = vmatprep.subr.bf16.mxu0 0
      %843 = vmatpush1.bf16.msra.mxu0 0
      %844 = vmatprep.subr.bf16.mxu0 0
      %845 = vmatpush1.bf16.msra.mxu0 0
      %846 = vmatprep.subr.bf16.mxu0 0
      %847 = vmatpush1.bf16.msra.mxu0 0
      %848 = vmatprep.subr.bf16.mxu0 0
      %849 = vmatpush1.bf16.msra.mxu0 0
      %850 = vmatprep.subr.bf16.mxu0 0
      %851 = vmatpush1.bf16.msra.mxu0 0
      %852 = vmatprep.subr.bf16.mxu0 0
      %853 = vmatpush1.bf16.msra.mxu0 0
      %854 = vmatprep.subr.bf16.mxu0 0
      %855 = vmatpush1.bf16.msra.mxu0 0
      %856 = vmatprep.subr.bf16.mxu0 0
      %857 = vmatpush1.bf16.msra.mxu0 0
      %858 = vmatprep.subr.bf16.mxu0 0
      %859 = vmatpush1.bf16.msra.mxu0 0
      %860 = vmatprep.subr.bf16.mxu0 0
      %861 = vmatpush1.bf16.msra.mxu0 0
      %862 = vmatprep.subr.bf16.mxu0 0
      %863 = vmatpush1.bf16.msra.mxu0 0
      %864 = vmatprep.mubr.bf16.mxu0 0
      %865 = vmatmul.mubr.bf16.gmra.mrb[0].mxu0 %v826
      %v866 = vpop.f32.mrb[0].mxu0
      %v867 = vadd.f32 0.0, %v866
      %v868 = vpop.f32.mrb[0].mxu0
      %v869 = vpop.f32.mrb[0].mxu0
      %v870 = vpop.f32.mrb[0].mxu0
      %871 = vdwg.mxu0
      %872 = vrot.lane.b32.xlu0 %v301, 64
      %v873 = vpop.permute.xlu0 %872
      %v875 = vsel %vm311, %v816, 0
      %v878 = vsel %vm828, %v873, 0
      %880 = vmatprep.subr.bf16.mxu0 0
      %881 = vmatpush1.bf16.msra.mxu0 %v878
      %882 = vmatprep.subr.bf16.mxu0 0
      %883 = vmatpush1.bf16.msra.mxu0 0
      %884 = vmatprep.subr.bf16.mxu0 0
      %885 = vmatpush1.bf16.msra.mxu0 0
      %886 = vmatprep.subr.bf16.mxu0 0
      %887 = vmatpush1.bf16.msra.mxu0 0
      %888 = vmatprep.subr.bf16.mxu0 0
      %889 = vmatpush1.bf16.msra.mxu0 0
      %890 = vmatprep.subr.bf16.mxu0 0
      %891 = vmatpush1.bf16.msra.mxu0 0
      %892 = vmatprep.subr.bf16.mxu0 0
      %893 = vmatpush1.bf16.msra.mxu0 0
      %894 = vmatprep.subr.bf16.mxu0 0
      %895 = vmatpush1.bf16.msra.mxu0 0
      %896 = vmatprep.subr.bf16.mxu0 0
      %897 = vmatpush1.bf16.msra.mxu0 0
      %898 = vmatprep.subr.bf16.mxu0 0
      %899 = vmatpush1.bf16.msra.mxu0 0
      %900 = vmatprep.subr.bf16.mxu0 0
      %901 = vmatpush1.bf16.msra.mxu0 0
      %902 = vmatprep.subr.bf16.mxu0 0
      %903 = vmatpush1.bf16.msra.mxu0 0
      %904 = vmatprep.subr.bf16.mxu0 0
      %905 = vmatpush1.bf16.msra.mxu0 0
      %906 = vmatprep.subr.bf16.mxu0 0
      %907 = vmatpush1.bf16.msra.mxu0 0
      %908 = vmatprep.subr.bf16.mxu0 0
      %909 = vmatpush1.bf16.msra.mxu0 0
      %910 = vmatprep.subr.bf16.mxu0 0
      %911 = vmatpush1.bf16.msra.mxu0 0
      %912 = vmatprep.mubr.bf16.mxu0 0
      %913 = vmatmul.mubr.bf16.gmra.mrb[0].mxu0 %v875
      %v914 = vpop.f32.mrb[0].mxu0
      %v915 = vadd.f32 0.0, %v914
      %v916 = vpop.f32.mrb[0].mxu0
      %v917 = vpop.f32.mrb[0].mxu0
      %v918 = vpop.f32.mrb[0].mxu0
      %919 = vdwg.mxu0
      %920 = vrot.lane.b32.xlu0 %v302, 64
      %v921 = vpop.permute.xlu0 %920
      %v923 = vsel %vm311, %v817, 0
      %v926 = vsel %vm828, %v921, 0
      %928 = vmatprep.subr.bf16.mxu0 0
      %929 = vmatpush1.bf16.msra.mxu0 %v926
      %930 = vmatprep.subr.bf16.mxu0 0
      %931 = vmatpush1.bf16.msra.mxu0 0
      %932 = vmatprep.subr.bf16.mxu0 0
      %933 = vmatpush1.bf16.msra.mxu0 0
      %934 = vmatprep.subr.bf16.mxu0 0
      %935 = vmatpush1.bf16.msra.mxu0 0
      %936 = vmatprep.subr.bf16.mxu0 0
      %937 = vmatpush1.bf16.msra.mxu0 0
      %938 = vmatprep.subr.bf16.mxu0 0
      %939 = vmatpush1.bf16.msra.mxu0 0
      %940 = vmatprep.subr.bf16.mxu0 0
      %941 = vmatpush1.bf16.msra.mxu0 0
      %942 = vmatprep.subr.bf16.mxu0 0
      %943 = vmatpush1.bf16.msra.mxu0 0
      %944 = vmatprep.subr.bf16.mxu0 0
      %945 = vmatpush1.bf16.msra.mxu0 0
      %946 = vmatprep.subr.bf16.mxu0 0
      %947 = vmatpush1.bf16.msra.mxu0 0
      %948 = vmatprep.subr.bf16.mxu0 0
      %949 = vmatpush1.bf16.msra.mxu0 0
      %950 = vmatprep.subr.bf16.mxu0 0
      %951 = vmatpush1.bf16.msra.mxu0 0
      %952 = vmatprep.subr.bf16.mxu0 0
      %953 = vmatpush1.bf16.msra.mxu0 0
      %954 = vmatprep.subr.bf16.mxu0 0
      %955 = vmatpush1.bf16.msra.mxu0 0
      %956 = vmatprep.subr.bf16.mxu0 0
      %957 = vmatpush1.bf16.msra.mxu0 0
      %958 = vmatprep.subr.bf16.mxu0 0
      %959 = vmatpush1.bf16.msra.mxu0 0
      %960 = vmatprep.mubr.bf16.mxu0 0
      %961 = vmatmul.mubr.bf16.gmra.mrb[0].mxu0 %v923
      %v962 = vpop.f32.mrb[0].mxu0
      %v963 = vadd.f32 0.0, %v962
      %v964 = vpop.f32.mrb[0].mxu0
      %v965 = vpop.f32.mrb[0].mxu0
      %v966 = vpop.f32.mrb[0].mxu0
      %967 = vdwg.mxu0
      %968 = vrot.lane.b32.xlu0 %v303, 64
      %v969 = vpop.permute.xlu0 %968
      %v971 = vsel %vm311, %v818, 0
      %v974 = vsel %vm828, %v969, 0
      %976 = vmatprep.subr.bf16.mxu0 0
      %977 = vmatpush1.bf16.msra.mxu0 %v974
      %978 = vmatprep.subr.bf16.mxu0 0
      %979 = vmatpush1.bf16.msra.mxu0 0
      %980 = vmatprep.subr.bf16.mxu0 0
      %981 = vmatpush1.bf16.msra.mxu0 0
      %982 = vmatprep.subr.bf16.mxu0 0
      %983 = vmatpush1.bf16.msra.mxu0 0
      %984 = vmatprep.subr.bf16.mxu0 0
      %985 = vmatpush1.bf16.msra.mxu0 0
      %986 = vmatprep.subr.bf16.mxu0 0
      %987 = vmatpush1.bf16.msra.mxu0 0
      %988 = vmatprep.subr.bf16.mxu0 0
      %989 = vmatpush1.bf16.msra.mxu0 0
      %990 = vmatprep.subr.bf16.mxu0 0
      %991 = vmatpush1.bf16.msra.mxu0 0
      %992 = vmatprep.subr.bf16.mxu0 0
      %993 = vmatpush1.bf16.msra.mxu0 0
      %994 = vmatprep.subr.bf16.mxu0 0
      %995 = vmatpush1.bf16.msra.mxu0 0
      %996 = vmatprep.subr.bf16.mxu0 0
      %997 = vmatpush1.bf16.msra.mxu0 0
      %998 = vmatprep.subr.bf16.mxu0 0
      %999 = vmatpush1.bf16.msra.mxu0 0
      %1000 = vmatprep.subr.bf16.mxu0 0
      %1001 = vmatpush1.bf16.msra.mxu0 0
      %1002 = vmatprep.subr.bf16.mxu0 0
      %1003 = vmatpush1.bf16.msra.mxu0 0
      %1004 = vmatprep.subr.bf16.mxu0 0
      %1005 = vmatpush1.bf16.msra.mxu0 0
      %1006 = vmatprep.subr.bf16.mxu0 0
      %1007 = vmatpush1.bf16.msra.mxu0 0
      %1008 = vmatprep.mubr.bf16.mxu0 0
      %1009 = vmatmul.mubr.bf16.gmra.mrb[0].mxu0 %v971
      %v1010 = vpop.f32.mrb[0].mxu0
      %v1011 = vadd.f32 0.0, %v1010
      %v1012 = vpop.f32.mrb[0].mxu0
      %v1013 = vpop.f32.mrb[0].mxu0
      %v1014 = vpop.f32.mrb[0].mxu0
      %1015 = vdwg.mxu0
      %1016 = vrot.lane.b32.xlu0 %v304, 64
      %v1017 = vpop.permute.xlu0 %1016
      %v1019 = vsel %vm311, %v819, 0
      %v1022 = vsel %vm828, %v1017, 0
      %1024 = vmatprep.subr.bf16.mxu0 0
      %1025 = vmatpush1.bf16.msra.mxu0 %v1022
      %1026 = vmatprep.subr.bf16.mxu0 0
      %1027 = vmatpush1.bf16.msra.mxu0 0
      %1028 = vmatprep.subr.bf16.mxu0 0
      %1029 = vmatpush1.bf16.msra.mxu0 0
      %1030 = vmatprep.subr.bf16.mxu0 0
      %1031 = vmatpush1.bf16.msra.mxu0 0
      %1032 = vmatprep.subr.bf16.mxu0 0
      %1033 = vmatpush1.bf16.msra.mxu0 0
      %1034 = vmatprep.subr.bf16.mxu0 0
      %1035 = vmatpush1.bf16.msra.mxu0 0
      %1036 = vmatprep.subr.bf16.mxu0 0
      %1037 = vmatpush1.bf16.msra.mxu0 0
      %1038 = vmatprep.subr.bf16.mxu0 0
      %1039 = vmatpush1.bf16.msra.mxu0 0
      %1040 = vmatprep.subr.bf16.mxu0 0
      %1041 = vmatpush1.bf16.msra.mxu0 0
      %1042 = vmatprep.subr.bf16.mxu0 0
      %1043 = vmatpush1.bf16.msra.mxu0 0
      %1044 = vmatprep.subr.bf16.mxu0 0
      %1045 = vmatpush1.bf16.msra.mxu0 0
      %1046 = vmatprep.subr.bf16.mxu0 0
      %1047 = vmatpush1.bf16.msra.mxu0 0
      %1048 = vmatprep.subr.bf16.mxu0 0
      %1049 = vmatpush1.bf16.msra.mxu0 0
      %1050 = vmatprep.subr.bf16.mxu0 0
      %1051 = vmatpush1.bf16.msra.mxu0 0
      %1052 = vmatprep.subr.bf16.mxu0 0
      %1053 = vmatpush1.bf16.msra.mxu0 0
      %1054 = vmatprep.subr.bf16.mxu0 0
      %1055 = vmatpush1.bf16.msra.mxu0 0
      %1056 = vmatprep.mubr.bf16.mxu0 0
      %1057 = vmatmul.mubr.bf16.gmra.mrb[0].mxu0 %v1019
      %v1058 = vpop.f32.mrb[0].mxu0
      %v1059 = vadd.f32 0.0, %v1058
      %v1060 = vpop.f32.mrb[0].mxu0
      %v1061 = vpop.f32.mrb[0].mxu0
      %v1062 = vpop.f32.mrb[0].mxu0
      %1063 = vdwg.mxu0
      %1064 = vrot.lane.b32.xlu0 %v305, 64
      %v1065 = vpop.permute.xlu0 %1064
      %v1067 = vsel %vm311, %v820, 0
      %v1070 = vsel %vm828, %v1065, 0
      %1072 = vmatprep.subr.bf16.mxu0 0
      %1073 = vmatpush1.bf16.msra.mxu0 %v1070
      %1074 = vmatprep.subr.bf16.mxu0 0
      %1075 = vmatpush1.bf16.msra.mxu0 0
      %1076 = vmatprep.subr.bf16.mxu0 0
      %1077 = vmatpush1.bf16.msra.mxu0 0
      %1078 = vmatprep.subr.bf16.mxu0 0
      %1079 = vmatpush1.bf16.msra.mxu0 0
      %1080 = vmatprep.subr.bf16.mxu0 0
      %1081 = vmatpush1.bf16.msra.mxu0 0
      %1082 = vmatprep.subr.bf16.mxu0 0
      %1083 = vmatpush1.bf16.msra.mxu0 0
      %1084 = vmatprep.subr.bf16.mxu0 0
      %1085 = vmatpush1.bf16.msra.mxu0 0
      %1086 = vmatprep.subr.bf16.mxu0 0
      %1087 = vmatpush1.bf16.msra.mxu0 0
      %1088 = vmatprep.subr.bf16.mxu0 0
      %1089 = vmatpush1.bf16.msra.mxu0 0
      %1090 = vmatprep.subr.bf16.mxu0 0
      %1091 = vmatpush1.bf16.msra.mxu0 0
      %1092 = vmatprep.subr.bf16.mxu0 0
      %1093 = vmatpush1.bf16.msra.mxu0 0
      %1094 = vmatprep.subr.bf16.mxu0 0
      %1095 = vmatpush1.bf16.msra.mxu0 0
      %1096 = vmatprep.subr.bf16.mxu0 0
      %1097 = vmatpush1.bf16.msra.mxu0 0
      %1098 = vmatprep.subr.bf16.mxu0 0
      %1099 = vmatpush1.bf16.msra.mxu0 0
      %1100 = vmatprep.subr.bf16.mxu0 0
      %1101 = vmatpush1.bf16.msra.mxu0 0
      %1102 = vmatprep.subr.bf16.mxu0 0
      %1103 = vmatpush1.bf16.msra.mxu0 0
      %1104 = vmatprep.mubr.bf16.mxu0 0
      %1105 = vmatmul.mubr.bf16.gmra.mrb[0].mxu0 %v1067
      %v1106 = vpop.f32.mrb[0].mxu0
      %v1107 = vadd.f32 0.0, %v1106
      %v1108 = vpop.f32.mrb[0].mxu0
      %v1109 = vpop.f32.mrb[0].mxu0
      %v1110 = vpop.f32.mrb[0].mxu0
      %1111 = vdwg.mxu0
      %1112 = vrot.lane.b32.xlu0 %v306, 64
      %v1113 = vpop.permute.xlu0 %1112
      %v1115 = vsel %vm311, %v821, 0
      %v1118 = vsel %vm828, %v1113, 0
      %1120 = vmatprep.subr.bf16.mxu0 0
      %1121 = vmatpush1.bf16.msra.mxu0 %v1118
      %1122 = vmatprep.subr.bf16.mxu0 0
      %1123 = vmatpush1.bf16.msra.mxu0 0
      %1124 = vmatprep.subr.bf16.mxu0 0
      %1125 = vmatpush1.bf16.msra.mxu0 0
      %1126 = vmatprep.subr.bf16.mxu0 0
      %1127 = vmatpush1.bf16.msra.mxu0 0
      %1128 = vmatprep.subr.bf16.mxu0 0
      %1129 = vmatpush1.bf16.msra.mxu0 0
      %1130 = vmatprep.subr.bf16.mxu0 0
      %1131 = vmatpush1.bf16.msra.mxu0 0
      %1132 = vmatprep.subr.bf16.mxu0 0
      %1133 = vmatpush1.bf16.msra.mxu0 0
      %1134 = vmatprep.subr.bf16.mxu0 0
      %1135 = vmatpush1.bf16.msra.mxu0 0
      %1136 = vmatprep.subr.bf16.mxu0 0
      %1137 = vmatpush1.bf16.msra.mxu0 0
      %1138 = vmatprep.subr.bf16.mxu0 0
      %1139 = vmatpush1.bf16.msra.mxu0 0
      %1140 = vmatprep.subr.bf16.mxu0 0
      %1141 = vmatpush1.bf16.msra.mxu0 0
      %1142 = vmatprep.subr.bf16.mxu0 0
      %1143 = vmatpush1.bf16.msra.mxu0 0
      %1144 = vmatprep.subr.bf16.mxu0 0
      %1145 = vmatpush1.bf16.msra.mxu0 0
      %1146 = vmatprep.subr.bf16.mxu0 0
      %1147 = vmatpush1.bf16.msra.mxu0 0
      %1148 = vmatprep.subr.bf16.mxu0 0
      %1149 = vmatpush1.bf16.msra.mxu0 0
      %1150 = vmatprep.subr.bf16.mxu0 0
      %1151 = vmatpush1.bf16.msra.mxu0 0
      %1152 = vmatprep.mubr.bf16.mxu0 0
      %1153 = vmatmul.mubr.bf16.gmra.mrb[0].mxu0 %v1115
      %v1154 = vpop.f32.mrb[0].mxu0
      %v1155 = vadd.f32 0.0, %v1154
      %v1156 = vpop.f32.mrb[0].mxu0
      %v1157 = vpop.f32.mrb[0].mxu0
      %v1158 = vpop.f32.mrb[0].mxu0
      %1159 = vdwg.mxu0
      %1160 = vrot.lane.b32.xlu0 %v307, 64
      %v1161 = vpop.permute.xlu0 %1160
      %v1163 = vsel %vm311, %v822, 0
      %v1166 = vsel %vm828, %v1161, 0
      %1168 = vmatprep.subr.bf16.mxu0 0
      %1169 = vmatpush1.bf16.msra.mxu0 %v1166
      %1170 = vmatprep.subr.bf16.mxu0 0
      %1171 = vmatpush1.bf16.msra.mxu0 0
      %1172 = vmatprep.subr.bf16.mxu0 0
      %1173 = vmatpush1.bf16.msra.mxu0 0
      %1174 = vmatprep.subr.bf16.mxu0 0
      %1175 = vmatpush1.bf16.msra.mxu0 0
      %1176 = vmatprep.subr.bf16.mxu0 0
      %1177 = vmatpush1.bf16.msra.mxu0 0
      %1178 = vmatprep.subr.bf16.mxu0 0
      %1179 = vmatpush1.bf16.msra.mxu0 0
      %1180 = vmatprep.subr.bf16.mxu0 0
      %1181 = vmatpush1.bf16.msra.mxu0 0
      %1182 = vmatprep.subr.bf16.mxu0 0
      %1183 = vmatpush1.bf16.msra.mxu0 0
      %1184 = vmatprep.subr.bf16.mxu0 0
      %1185 = vmatpush1.bf16.msra.mxu0 0
      %1186 = vmatprep.subr.bf16.mxu0 0
      %1187 = vmatpush1.bf16.msra.mxu0 0
      %1188 = vmatprep.subr.bf16.mxu0 0
      %1189 = vmatpush1.bf16.msra.mxu0 0
      %1190 = vmatprep.subr.bf16.mxu0 0
      %1191 = vmatpush1.bf16.msra.mxu0 0
      %1192 = vmatprep.subr.bf16.mxu0 0
      %1193 = vmatpush1.bf16.msra.mxu0 0
      %1194 = vmatprep.subr.bf16.mxu0 0
      %1195 = vmatpush1.bf16.msra.mxu0 0
      %1196 = vmatprep.subr.bf16.mxu0 0
      %1197 = vmatpush1.bf16.msra.mxu0 0
      %1198 = vmatprep.subr.bf16.mxu0 0
      %1199 = vmatpush1.bf16.msra.mxu0 0
      %1200 = vmatprep.mubr.bf16.mxu0 0
      %1201 = vmatmul.mubr.bf16.gmra.mrb[0].mxu0 %v1163
      %v1202 = vpop.f32.mrb[0].mxu0
      %v1203 = vadd.f32 0.0, %v1202
      %v1204 = vpop.f32.mrb[0].mxu0
      %v1205 = vpop.f32.mrb[0].mxu0
      %v1206 = vpop.f32.mrb[0].mxu0
      %1207 = vdwg.mxu0
      %1210 = vrot.lane.b32.xlu0 %v963, 8
      %v1211 = vpop.permute.xlu0 %1210
      %1212 = vrot.lane.b32.xlu0 %v1011, 8
      %v1213 = vpop.permute.xlu0 %1212
      %1218 = vrot.lane.b32.xlu0 %v1059, 16
      %v1219 = vpop.permute.xlu0 %1218
      %1220 = vrot.lane.b32.xlu0 %v1107, 16
      %v1221 = vpop.permute.xlu0 %1220
      %1226 = vrot.lane.b32.xlu0 %v1155, 24
      %v1227 = vpop.permute.xlu0 %1226
      %1228 = vrot.lane.b32.xlu0 %v1203, 24
      %v1229 = vpop.permute.xlu0 %1228
      %v1232 = vsel %vm311, %v867, %v1211
      %v1233 = vsel %vm311, %v915, %v1213
      %vm1234 = vcmask 130048
      %v1235 = vsel %vm1234, %v1232, %v1219
      %v1236 = vsel %vm1234, %v1233, %v1221
      %vm1237 = vcmask 195584
      %v1238 = vsel %vm1237, %v1235, %v1227
      %v1239 = vsel %vm1237, %v1236, %v1229
      %v1240 = vpack.c.bf16 %v1239, %v1238
      %v1241 = vld [vmem:[#allocation13] sm:$0xf]
      %v1242 = vld [vmem:[#allocation13 + $0x4] sm:$0xf]
      %v1243 = vld [vmem:[#allocation13 + $0x8] sm:$0xf]
      %v1244 = vld [vmem:[#allocation13 + $0xc] sm:$0xf]
      %v1245 = vld [vmem:[#allocation19] sm:$0x1]
      %v1246 = vlaneseq
      %v1247 = vshrl.u32 %v1246, 7
      %v1248 = vsub.s32 0, %v1247
      %v1249 = vrot.slane %v1245, %v1248
      %v1254 = vunpack.c.l.b16 %v1241
      %v1255 = vunpack.c.l.b16 %v1242
      %v1256 = vunpack.c.l.b16 %v1243
      %v1257 = vunpack.c.l.b16 %v1244
      %v1258 = vpack.c.b16 %v1255, %v1254
      %v1259 = vpack.c.b16 %v1257, %v1256
      %v1263 = vsel %vm205, %v1240, 0
      %1265 = vmatprep.subr.bf16.mxu0 0
      %1266 = vmatpush1.bf16.msra.mxu0 %v1258
      %1267 = vmatprep.subr.bf16.mxu0 0
      %1268 = vmatpush1.bf16.msra.mxu0 %v1259
      %1269 = vmatprep.subr.bf16.mxu0 0
      %1270 = vmatpush1.bf16.msra.mxu0 0
      %1271 = vmatprep.subr.bf16.mxu0 0
      %1272 = vmatpush1.bf16.msra.mxu0 0
      %1273 = vmatprep.subr.bf16.mxu0 0
      %1274 = vmatpush1.bf16.msra.mxu0 0
      %1275 = vmatprep.subr.bf16.mxu0 0
      %1276 = vmatpush1.bf16.msra.mxu0 0
      %1277 = vmatprep.subr.bf16.mxu0 0
      %1278 = vmatpush1.bf16.msra.mxu0 0
      %1279 = vmatprep.subr.bf16.mxu0 0
      %1280 = vmatpush1.bf16.msra.mxu0 0
      %1281 = vmatprep.subr.bf16.mxu0 0
      %1282 = vmatpush1.bf16.msra.mxu0 0
      %1283 = vmatprep.subr.bf16.mxu0 0
      %1284 = vmatpush1.bf16.msra.mxu0 0
      %1285 = vmatprep.subr.bf16.mxu0 0
      %1286 = vmatpush1.bf16.msra.mxu0 0
      %1287 = vmatprep.subr.bf16.mxu0 0
      %1288 = vmatpush1.bf16.msra.mxu0 0
      %1289 = vmatprep.subr.bf16.mxu0 0
      %1290 = vmatpush1.bf16.msra.mxu0 0
      %1291 = vmatprep.subr.bf16.mxu0 0
      %1292 = vmatpush1.bf16.msra.mxu0 0
      %1293 = vmatprep.subr.bf16.mxu0 0
      %1294 = vmatpush1.bf16.msra.mxu0 0
      %1295 = vmatprep.subr.bf16.mxu0 0
      %1296 = vmatpush1.bf16.msra.mxu0 0
      %1297 = vmatprep.mubr.bf16.mxu0 0
      %1298 = vmatmul.mubr.bf16.gmra.mrb[0].mxu0 %v1263
      %v1299 = vpop.f32.mrb[0].mxu0
      %v1300 = vadd.f32 %v1249, %v1299
      %v1301 = vpop.f32.mrb[0].mxu0
      %v1302 = vpop.f32.mrb[0].mxu0
      %v1303 = vadd.f32 %v1249, %v1302
      %v1304 = vpop.f32.mrb[0].mxu0
      %1305 = vdwg.mxu0
      %v1306 = vadd.f32 %v1300, %v173
      %v1307 = vadd.f32 %v1303, %v174
      %v1308 = vld [vmem:[#allocation19 + $0x1] sm:$0x1]
      %v1309 = vld [vmem:[#allocation19 + $0x2] sm:$0x1]
      %v1310 = vsel %vm205, %v1306, 0.0
      %1311 = vadd.xlane.f32.xlu0 %v1310
      %v1312 = vpop.xlane.xlu0 %1311
      %v1313 = vsel %vm205, %v1307, 0.0
      %1314 = vadd.xlane.f32.xlu0 %v1313
      %v1315 = vpop.xlane.xlu0 %1314
      %v1316 = vrcp.pop 32.0
      %v1317 = vmul.f32 %v1312, %v1316
      %v1318 = vmul.f32 %v1315, %v1316
      %v1319 = vsub.f32 %v1306, %v1317
      %v1320 = vsub.f32 %v1307, %v1318
      %v1321 = vmul.f32 %v1319, %v1319
      %v1322 = vmul.f32 %v1320, %v1320
      %v1323 = vsel %vm205, %v1321, 0.0
      %1324 = vadd.xlane.f32.xlu0 %v1323
      %v1325 = vpop.xlane.xlu0 %1324
      %v1326 = vsel %vm205, %v1322, 0.0
      %1327 = vadd.xlane.f32.xlu0 %v1326
      %v1328 = vpop.xlane.xlu0 %1327
      %v1329 = vmul.f32 %v1325, %v1316
      %v1330 = vmul.f32 %v1328, %v1316
      %v1331 = vadd.f32 %v1329, 1e-05
      %v1332 = vadd.f32 %v1330, 1e-05
      %v1333 = vrsqrt.pop %v1331
      %v1334 = vrsqrt.pop %v1332
      %v1335 = vmul.f32 %v1319, %v1333
      %v1336 = vmul.f32 %v1320, %v1334
      %v1337 = vlaneseq
      %v1338 = vshrl.u32 %v1337, 7
      %v1339 = vsub.s32 0, %v1338
      %v1340 = vrot.slane %v1308, %v1339
      %v1341 = vmul.f32 %v1335, %v1340
      %v1342 = vmul.f32 %v1336, %v1340
      %v1343 = vlaneseq
      %v1344 = vshrl.u32 %v1343, 7
      %v1345 = vsub.s32 0, %v1344
      %v1346 = vrot.slane %v1309, %v1345
      %v1347 = vadd.f32 %v1341, %v1346
      %v1348 = vadd.f32 %v1342, %v1346
      %1350 = vset.pattern.permute.xlu0 0
      %1351 = vperm.xlu0 %1350, %v175
      %v1352 = vpop.permute.xlu0 %1351
      %1355 = vset.pattern.permute.xlu0 0
      %1356 = vperm.xlu0 %1355, %v176
      %v1357 = vpop.permute.xlu0 %1356
      %v1359 = vmul.f32 %v1347, %v1352
      %v1360 = vmul.f32 %v1348, %v1357
      %1361 = vst.msk [vmem:[#allocation2] sm:$0xff] %vm205, %v1359
      %1362 = vst.msk [vmem:[#allocation2 + $0x8] sm:$0xff] %vm205, %v1360
      %1363 = vst.msk [vmem:[#allocation3] sm:$0xff] %vm205, 0.0
      %1364 = vst.msk [vmem:[#allocation3 + $0x8] sm:$0xff] %vm205, 0.0
    $region85: #{tpu_custom_call.1} parent=1 // pred_fallthru
      _
    %v1365 = vld [vmem:[#allocation2] sm:$0xff]
    %v1366 = vld [vmem:[#allocation2 + $0x8] sm:$0xff]
    %v1367 = vpack.c.bf16 %v1366, %v1365
    %v1368 = vld [vmem:[#allocation15] sm:$0xf]
    %v1369 = vld [vmem:[#allocation15 + $0x4] sm:$0xf]
    %v1370 = vld [vmem:[#allocation15 + $0x8] sm:$0xf]
    %v1371 = vld [vmem:[#allocation15 + $0xc] sm:$0xf]
    %v1372 = vld [vmem:[#allocation16] sm:$0x1]
    %v1374 = vlaneseq
    %v1375 = vshrl.u32 %v1374, 7
    %v1376 = vsub.s32 0, %v1375
    %v1377 = vrot.slane %v1372, %v1376
    %v1383 = vunpack.c.l.b16 %v1368
    %v1384 = vunpack.c.l.b16 %v1369
    %v1385 = vunpack.c.l.b16 %v1370
    %v1386 = vunpack.c.l.b16 %v1371
    %v1387 = vpack.c.b16 %v1384, %v1383
    %v1388 = vpack.c.b16 %v1386, %v1385
    %vm1391 = vcmask 261120
    %v1393 = vsel %vm1391, %v1367, 0
    %1395 = vmatprep.subr.bf16.mxu0 0
    %1396 = vmatpush1.bf16.msra.mxu0 %v1387
    %1397 = vmatprep.subr.bf16.mxu0 0
    %1398 = vmatpush1.bf16.msra.mxu0 %v1388
    %1399 = vmatprep.subr.bf16.mxu0 0
    %1400 = vmatpush1.bf16.msra.mxu0 0
    %1401 = vmatprep.subr.bf16.mxu0 0
    %1402 = vmatpush1.bf16.msra.mxu0 0
    %1403 = vmatprep.subr.bf16.mxu0 0
    %1404 = vmatpush1.bf16.msra.mxu0 0
    %1405 = vmatprep.subr.bf16.mxu0 0
    %1406 = vmatpush1.bf16.msra.mxu0 0
    %1407 = vmatprep.subr.bf16.mxu0 0
    %1408 = vmatpush1.bf16.msra.mxu0 0
    %1409 = vmatprep.subr.bf16.mxu0 0
    %1410 = vmatpush1.bf16.msra.mxu0 0
    %1411 = vmatprep.subr.bf16.mxu0 0
    %1412 = vmatpush1.bf16.msra.mxu0 0
    %1413 = vmatprep.subr.bf16.mxu0 0
    %1414 = vmatpush1.bf16.msra.mxu0 0
    %1415 = vmatprep.subr.bf16.mxu0 0
    %1416 = vmatpush1.bf16.msra.mxu0 0
    %1417 = vmatprep.subr.bf16.mxu0 0
    %1418 = vmatpush1.bf16.msra.mxu0 0
    %1419 = vmatprep.subr.bf16.mxu0 0
    %1420 = vmatpush1.bf16.msra.mxu0 0
    %1421 = vmatprep.subr.bf16.mxu0 0
    %1422 = vmatpush1.bf16.msra.mxu0 0
    %1423 = vmatprep.subr.bf16.mxu0 0
    %1424 = vmatpush1.bf16.msra.mxu0 0
    %1425 = vmatprep.subr.bf16.mxu0 0
    %1426 = vmatpush1.bf16.msra.mxu0 0
    %1427 = vmatprep.mubr.bf16.mxu0 0
    %1428 = vmatmul.mubr.bf16.gmra.mrb[0].mxu0 %v1393
    %v1429 = vpop.f32.mrb[0].mxu0
    %v1430 = vadd.f32 %v1377, %v1429
    %v1431 = vpop.f32.mrb[0].mxu0
    %v1432 = vpop.f32.mrb[0].mxu0
    %v1433 = vadd.f32 %v1377, %v1432
    %v1434 = vpop.f32.mrb[0].mxu0
    %1435 = vdwg.mxu0
    %v1436 = vmax.f32 %v1430, 0.0
    %v1437 = vmax.f32 %v1433, 0.0
    %v1438 = vld [vmem:[#allocation3] sm:$0xff]
    %v1439 = vld [vmem:[#allocation3 + $0x8] sm:$0xff]
    %v1440 = vpack.c.bf16 %v1437, %v1436
    %v1441 = vld [vmem:[#allocation18] sm:$0xf]
    %v1442 = vld [vmem:[#allocation18 + $0x4] sm:$0xf]
    %v1443 = vld [vmem:[#allocation18 + $0x8] sm:$0xf]
    %v1444 = vld [vmem:[#allocation18 + $0xc] sm:$0xf]
    %v1449 = vunpack.c.l.b16 %v1441
    %v1450 = vunpack.c.l.b16 %v1442
    %v1451 = vunpack.c.l.b16 %v1443
    %v1452 = vunpack.c.l.b16 %v1444
    %v1453 = vpack.c.b16 %v1450, %v1449
    %v1454 = vpack.c.b16 %v1452, %v1451
    %v1458 = vsel %vm1391, %v1440, 0
    %1460 = vmatprep.subr.bf16.mxu0 0
    %1461 = vmatpush1.bf16.msra.mxu0 %v1453
    %1462 = vmatprep.subr.bf16.mxu0 0
    %1463 = vmatpush1.bf16.msra.mxu0 %v1454
    %1464 = vmatprep.subr.bf16.mxu0 0
    %1465 = vmatpush1.bf16.msra.mxu0 0
    %1466 = vmatprep.subr.bf16.mxu0 0
    %1467 = vmatpush1.bf16.msra.mxu0 0
    %1468 = vmatprep.subr.bf16.mxu0 0
    %1469 = vmatpush1.bf16.msra.mxu0 0
    %1470 = vmatprep.subr.bf16.mxu0 0
    %1471 = vmatpush1.bf16.msra.mxu0 0
    %1472 = vmatprep.subr.bf16.mxu0 0
    %1473 = vmatpush1.bf16.msra.mxu0 0
    %1474 = vmatprep.subr.bf16.mxu0 0
    %1475 = vmatpush1.bf16.msra.mxu0 0
    %1476 = vmatprep.subr.bf16.mxu0 0
    %1477 = vmatpush1.bf16.msra.mxu0 0
    %1478 = vmatprep.subr.bf16.mxu0 0
    %1479 = vmatpush1.bf16.msra.mxu0 0
    %1480 = vmatprep.subr.bf16.mxu0 0
    %1481 = vmatpush1.bf16.msra.mxu0 0
    %1482 = vmatprep.subr.bf16.mxu0 0
    %1483 = vmatpush1.bf16.msra.mxu0 0
    %1484 = vmatprep.subr.bf16.mxu0 0
    %1485 = vmatpush1.bf16.msra.mxu0 0
    %1486 = vmatprep.subr.bf16.mxu0 0
    %1487 = vmatpush1.bf16.msra.mxu0 0
    %1488 = vmatprep.subr.bf16.mxu0 0
    %1489 = vmatpush1.bf16.msra.mxu0 0
    %1490 = vmatprep.subr.bf16.mxu0 0
    %1491 = vmatpush1.bf16.msra.mxu0 0
    %1492 = vmatprep.mubr.bf16.mxu0 0
    %1493 = vmatmul.mubr.bf16.gmra.mrb[0].mxu0 %v1458
    %v1494 = vpop.f32.mrb[0].mxu0
    %v1495 = vadd.f32 0.0, %v1494
    %v1496 = vpop.f32.mrb[0].mxu0
    %v1497 = vpop.f32.mrb[0].mxu0
    %v1498 = vadd.f32 0.0, %v1497
    %v1499 = vpop.f32.mrb[0].mxu0
    %1500 = vdwg.mxu0
    %v1501 = vadd.f32 %v1438, %v1495
    %v1502 = vadd.f32 %v1439, %v1498
    %1503 = vst.msk [vmem:[#allocation3] sm:$0xff] %vm1391, %v1501
    %1504 = vst.msk [vmem:[#allocation3 + $0x8] sm:$0xff] %vm1391, %v1502
    // Predicated region
    $region86: #{tpu_custom_call.1} parent=1 // pred_check
      %p1505 = pneg %p169
    $region87: #{tpu_custom_call.1} parent=1 // pred_check_branch
      %1507 = sbr.rel (%p1505) target = $region89
    $region88: #{tpu_custom_call.1} parent=1 // pred_region
      %v1508 = vld [vmem:[#allocation3] sm:$0xff]
      %v1509 = vld [vmem:[#allocation3 + $0x8] sm:$0xff]
      %v1510 = vld [vmem:[#allocation19 + $0x3] sm:$0x1]
      %v1511 = vlaneseq
      %v1512 = vshrl.u32 %v1511, 7
      %v1513 = vsub.s32 0, %v1512
      %v1514 = vrot.slane %v1510, %v1513
      %v1515 = vadd.f32 %v1508, %v1514
      %v1516 = vadd.f32 %v1509, %v1514
      %v1517 = vld [vmem:[#allocation2] sm:$0xff]
      %v1518 = vld [vmem:[#allocation2 + $0x8] sm:$0xff]
      %v1519 = vadd.f32 %v1515, %v1517
      %v1520 = vadd.f32 %v1516, %v1518
      %v1521 = vld [vmem:[#allocation19 + $0x4] sm:$0x1]
      %v1522 = vld [vmem:[#allocation19 + $0x5] sm:$0x1]
      %v1523 = vsel %vm1391, %v1519, 0.0
      %1524 = vadd.xlane.f32.xlu0 %v1523
      %v1525 = vpop.xlane.xlu0 %1524
      %v1526 = vsel %vm1391, %v1520, 0.0
      %1527 = vadd.xlane.f32.xlu0 %v1526
      %v1528 = vpop.xlane.xlu0 %1527
      %v1529 = vrcp.pop 32.0
      %v1530 = vmul.f32 %v1525, %v1529
      %v1531 = vmul.f32 %v1528, %v1529
      %v1532 = vsub.f32 %v1519, %v1530
      %v1533 = vsub.f32 %v1520, %v1531
      %v1534 = vmul.f32 %v1532, %v1532
      %v1535 = vmul.f32 %v1533, %v1533
      %v1536 = vsel %vm1391, %v1534, 0.0
      %1537 = vadd.xlane.f32.xlu0 %v1536
      %v1538 = vpop.xlane.xlu0 %1537
      %v1539 = vsel %vm1391, %v1535, 0.0
      %1540 = vadd.xlane.f32.xlu0 %v1539
      %v1541 = vpop.xlane.xlu0 %1540
      %v1542 = vmul.f32 %v1538, %v1529
      %v1543 = vmul.f32 %v1541, %v1529
      %v1544 = vadd.f32 %v1542, 1e-05
      %v1545 = vadd.f32 %v1543, 1e-05
      %v1546 = vrsqrt.pop %v1544
      %v1547 = vrsqrt.pop %v1545
      %v1548 = vmul.f32 %v1532, %v1546
      %v1549 = vmul.f32 %v1533, %v1547
      %v1550 = vlaneseq
      %v1551 = vshrl.u32 %v1550, 7
      %v1552 = vsub.s32 0, %v1551
      %v1553 = vrot.slane %v1521, %v1552
      %v1554 = vmul.f32 %v1548, %v1553
      %v1555 = vmul.f32 %v1549, %v1553
      %v1556 = vlaneseq
      %v1557 = vshrl.u32 %v1556, 7
      %v1558 = vsub.s32 0, %v1557
      %v1559 = vrot.slane %v1522, %v1558
      %v1560 = vadd.f32 %v1554, %v1559
      %v1561 = vadd.f32 %v1555, %v1559
      %v1562 = vld [vmem:[#allocation7] sm:$0xff]
      %v1563 = vld [vmem:[#allocation7 + $0x8] sm:$0xff]
      %1565 = vset.pattern.permute.xlu0 0
      %1566 = vperm.xlu0 %1565, %v1562
      %v1567 = vpop.permute.xlu0 %1566
      %1570 = vset.pattern.permute.xlu0 0
      %1571 = vperm.xlu0 %1570, %v1563
      %v1572 = vpop.permute.xlu0 %1571
      %v1574 = vmul.f32 %v1560, %v1567
      %v1575 = vmul.f32 %v1561, %v1572
      %1576 = vst.msk [vmem:[#allocation21] sm:$0xff] %vm1391, %v1574
      %1577 = vst.msk [vmem:[#allocation21 + $0x8] sm:$0xff] %vm1391, %v1575
    $region89: #{tpu_custom_call.1} parent=1 // pred_fallthru
      _
    // Predicated region
    $region90: #{tpu_custom_call.1} parent=1 // pred_check
      _
    $region91: #{tpu_custom_call.1} parent=1 // pred_check_branch
      %1579 = sbr.rel (0) target = $region93
    $region92: #{tpu_custom_call.1} parent=1 // pred_region
      %s1581 = ssub.s32 256, 256
      %1582 = vsyncadd [#allocation6], %s1581
      %s1583 = sshll.u32 [#allocation21], 4
      %s1584 = int_to_ptr.vmem [resolvable:$true] %s1583
      %1589 = dma.vmem_to_hbm [thread:$0]  %s1584, 256, %s10, [#allocation6], 128, 128, 8
    $region93: #{tpu_custom_call.1} parent=1 // pred_fallthru
      _
    // Predicated region
    $region94: #{tpu_custom_call.1} parent=1 // pred_check
      _
    $region95: #{tpu_custom_call.1} parent=1 // pred_check_branch
      %1591 = sbr.rel (0) target = $region97
    $region96: #{tpu_custom_call.1} parent=1 // pred_region
      %1592 = dma.done [#allocation6], 256
    $region97: #{tpu_custom_call.1} parent=1 // pred_fallthru
      _
    %1593 = vsyncpa [#allocation5], 1
    %1594 = vsyncpa [#allocation8], 1
    %1595 = vsyncpa [#allocation11], 1
    %1596 = vsyncpa [#allocation14], 1
    %1597 = vsyncpa [#allocation17], 1
    %1598 = vsyncpa [#allocation20], 1
    %1599 = vsyncpa [#allocation6], 1

</llo_original>
